<compile_context>
chip_gen: v5e
topology: v5e:2x2
jax: 0.10.0
libtpu: 0.0.40
codegen_flags: <defaults>
</compile_context>

<pallas_src>
import functools

import numpy as np
import jax
import jax.numpy as jnp
from jax import lax
from jax.experimental import pallas as pl
from jax.experimental.pallas import tpu as pltpu

BN_EPS = 1e-5
POOL_OUT = 2062
CHUNK = 512                 # layer-3 output blocks (lanes) per grid step, mult of 128
HALO = 3                    # input-block halo on each side of a chunk window
WIN = CHUNK + 2 * HALO      # input window width read per chunk


# ----------------------------------------------------------------------------
# Kernel: fused conv1+bn+relu, conv2+bn+relu, conv3+bn+relu for one chunk.
# Polyphase form at the final (L/8) rate: activation row = phase*C + channel,
# column = block index.  Each layer: out[:, b] = Wm@x[:, b-1] + W0@x[:, b] +
# Wp@x[:, b+1] + bias, done as ONE matmul with stacked LHS, shifts as slices.
# ----------------------------------------------------------------------------
def _encoder_kernel(x_ref, w_ref, o_ref, *, lb):
    c = pl.program_id(1)
    start = pl.multiple_of(c * CHUNK, 128)           # window start in padded slab
    x = x_ref[0, :, pl.ds(start, WIN)]                # (8, WIN); col u <-> block c*CHUNK-3+u

    w = w_ref[...]                                    # (96, 128), resident across grid
    w1, w2, w3 = w[:, 0:8], w[:, 8:40], w[:, 40:72]   # [Wm;W0;Wp] per layer
    b1, b2, b3 = w[0:32, 72:73], w[32:64, 72:73], w[64:96, 72:73]

    # Hoisted validity row over the window's global block indices (used twice).
    g = lax.broadcasted_iota(jnp.int32, (1, WIN), 1) + (c * CHUNK - HALO)
    valid = jnp.logical_and(g >= 0, g < lb).astype(jnp.float32)       # (1, WIN)

    def layer(h, ws, bias, w_out):
        # h: (R_in, w_in).  out[:, v] = Wm@h[:, v] + W0@h[:, v+1] + Wp@h[:, v+2] + b
        z = jnp.dot(ws, h, preferred_element_type=jnp.float32)        # (96, w_in)
        acc = (z[0:32, 0:w_out] + z[32:64, 1:w_out + 1]
               + z[64:96, 2:w_out + 2] + bias)
        return jnp.maximum(acc, 0.0)

    # Out-of-range blocks of the intermediates must read as exact zeros for the
    # next layer's padding=1 semantics -> mask-multiply y1/y2 only (y3 never needs it).
    y1 = layer(x, w1, b1, WIN - 2) * valid[:, 1:WIN - 1]   # blocks c*CHUNK-2 ...
    y2 = layer(y1, w2, b2, WIN - 4) * valid[:, 2:WIN - 2]  # blocks c*CHUNK-1 ...
    o_ref[0] = layer(y2, w3, b3, CHUNK)                    # blocks c*CHUNK ... (32, CHUNK)


# ----------------------------------------------------------------------------
# Forward pass
# ----------------------------------------------------------------------------
def wav_encoder_fwd(enc, x_ncw):
    """x_ncw: (N, 1, L) float32 with L % 8 == 0  ->  (N, 32, 2062) float32."""
    n, c_in, length = x_ncw.shape
    assert c_in == 1 and length % 8 == 0
    lb = length // 8
    nchunks = pl.cdiv(lb, CHUNK)
    out_w = nchunks * CHUNK
    slab_w = out_w + 128                      # covers out_w + 2*HALO, multiple of 128

    # Polyphase repack: xp[n, r, b] = x[n, 0, 8*b + r]; HALO zero blocks on the left.
    xp = x_ncw.reshape(n, lb, 8).transpose(0, 2, 1)                    # (N, 8, lb)
    xp = jnp.pad(xp, ((0, 0), (0, 0), (HALO, slab_w - HALO - lb)))     # (N, 8, slab_w)

    y3 = pl.pallas_call(
        functools.partial(_encoder_kernel, lb=lb),
        out_shape=jax.ShapeDtypeStruct((n, 32, out_w), jnp.float32),
        grid=(n, nchunks),
        in_specs=[
            # Full padded slab per batch element; index_map ignores the chunk axis
            # so the ~150 KB block stays VMEM-resident across all chunks.
            pl.BlockSpec((1, 8, slab_w), lambda b, c: (b, 0, 0)),
            # One packed weight/bias constant, resident for the whole grid.
            pl.BlockSpec((96, 128), lambda b, c: (0, 0)),
        ],
        out_specs=pl.BlockSpec((1, 32, CHUNK), lambda b, c: (b, 0, c)),
        compiler_params=pltpu.CompilerParams(
            dimension_semantics=("parallel", "parallel")),
    )(xp, enc["wpack"])

    return _adaptive_avg_pool1d(y3[:, :, :lb], POOL_OUT)


def _adaptive_avg_pool1d(x, out_size):
    """Matches torch.nn.AdaptiveAvgPool1d.  Fast reshape+mean when divisible."""
    n, ch, l_in = x.shape
    if l_in % out_size == 0:
        f = l_in // out_size
        return x.reshape(n, ch, out_size, f).mean(axis=-1)
    # General fallback (floor/ceil window edges) -- gather-based, rarely used.
    i = np.arange(out_size)
    starts = (i * l_in) // out_size
    ends = ((i + 1) * l_in + out_size - 1) // out_size
    kmax = int((ends - starts).max())
    raw = starts[:, None] + np.arange(kmax)[None, :]
    mask = (raw < ends[:, None]).astype(np.float32)
    idx = np.minimum(raw, l_in - 1)
    g = x[:, :, jnp.asarray(idx)]
    m = jnp.asarray(mask)[None, None]
    cnt = jnp.asarray((ends - starts).astype(np.float32))[None, None]
    return (g * m).sum(-1) / cnt


# ----------------------------------------------------------------------------
# Parameters (PyTorch-style init, BN in inference mode) and one-time folding of
# BN + conv taps into the stacked polyphase matrices consumed by the kernel.
# ----------------------------------------------------------------------------
def _conv_init(key, c_out, c_in, k):
    k1, k2 = jax.random.split(key)
    bound = 1.0 / np.sqrt(c_in * k)
    w = jax.random.uniform(k1, (c_out, c_in, k), jnp.float32, -bound, bound)
    b = jax.random.uniform(k2, (c_out,), jnp.float32, -bound, bound)
    return w, b


def _bn_init(key, c):
    k1, k2, k3, k4 = jax.random.split(key, 4)
    return dict(gamma=jax.random.uniform(k1, (c,), jnp.float32, 0.7, 1.3),
                beta=0.2 * jax.random.normal(k2, (c,), jnp.float32),
                running_mean=0.2 * jax.random.normal(k3, (c,), jnp.float32),
                running_var=jax.random.uniform(k4, (c,), jnp.float32, 0.7, 1.3))


def init_params(key):
    ks = jax.random.split(key, 6)
    p = {}
    p["conv1_w"], p["conv1_b"] = _conv_init(ks[0], 8, 1, 4)
    p["conv2_w"], p["conv2_b"] = _conv_init(ks[1], 16, 8, 4)
    p["conv3_w"], p["conv3_b"] = _conv_init(ks[2], 32, 16, 4)
    p["bn1"], p["bn2"], p["bn3"] = _bn_init(ks[3], 8), _bn_init(ks[4], 16), _bn_init(ks[5], 32)
    return p


def _polyphase_mats(w, pp_in):
    """Conv1d(k=4,s=2,p=1) taps (C_out,C_in,4) -> Wm/W0/Wp each (pp_out*C_out, pp_in*C_in)
    applied to the polyphase input at block shifts -1 / 0 / +1 (phase-major rows)."""
    c_out, c_in, kk = w.shape
    pp_out = pp_in // 2
    mats = {d: np.zeros((pp_out * c_out, pp_in * c_in), np.float64) for d in (-1, 0, 1)}
    for p_out in range(pp_out):
        for k in range(kk):
            m = 2 * p_out + k - 1                  # input position within block
            if m < 0:
                d, p_in = -1, pp_in + m
            elif m >= pp_in:
                d, p_in = 1, m - pp_in
            else:
                d, p_in = 0, m
            mats[d][p_out * c_out:(p_out + 1) * c_out,
                    p_in * c_in:(p_in + 1) * c_in] += w[:, :, k]
    return mats[-1], mats[0], mats[1]


def prepare_encoder(params):
    """One-time prep (outside the jitted forward): fold BN into the conv taps, stack
    [Wm;W0;Wp] per layer and pack everything into a single (96,128) constant."""
    pack = np.zeros((96, 128), np.float32)
    col = {1: (0, 8), 2: (8, 40), 3: (40, 72)}
    cfg = [(1, "conv1", "bn1", 8), (2, "conv2", "bn2", 4), (3, "conv3", "bn3", 2)]
    for idx, cname, bname, pp_in in cfg:
        w = np.asarray(params[f"{cname}_w"], np.float64)
        b = np.asarray(params[f"{cname}_b"], np.float64)
        bn = {k: np.asarray(v, np.float64) for k, v in params[bname].items()}
        scale = bn["gamma"] / np.sqrt(bn["running_var"] + BN_EPS)
        shift = bn["beta"] - bn["running_mean"] * scale
        wm, w0, wp = _polyphase_mats(w, pp_in)
        pp_out = pp_in // 2
        srow = np.tile(scale, pp_out)[:, None]
        stacked = np.concatenate([wm * srow, w0 * srow, wp * srow], axis=0)   # (96, R_in)
        c0, c1 = col[idx]
        pack[:, c0:c1] = stacked
        pack[(idx - 1) * 32:idx * 32, 72] = np.tile(b * scale + shift, pp_out)
    return {"wpack": jnp.asarray(pack)}


# ----------------------------------------------------------------------------
# Pure NumPy float64 reference of the PyTorch forward (BN in eval mode).
# ----------------------------------------------------------------------------
def _reference_forward(params, x):
    def conv_bn_relu(h, w, b, bn):
        hp = np.pad(h, ((0, 0), (0, 0), (1, 1)))
        win = np.lib.stride_tricks.sliding_window_view(hp, 4, axis=2)[:, :, ::2, :]
        y = np.einsum("nctk,ock->not", win, w) + b[None, :, None]
        scale = bn["gamma"] / np.sqrt(bn["running_var"] + BN_EPS)
        shift = bn["beta"] - bn["running_mean"] * scale
        return np.maximum(y * scale[None, :, None] + shift[None, :, None], 0.0)

    p = {k: (np.asarray(v, np.float64) if not isinstance(v, dict)
             else {kk: np.asarray(vv, np.float64) for kk, vv in v.items()})
         for k, v in params.items()}
    h = np.asarray(x, np.float64)
    h = conv_bn_relu(h, p["conv1_w"], p["conv1_b"], p["bn1"])
    h = conv_bn_relu(h, p["conv2_w"], p["conv2_b"], p["bn2"])
    h = conv_bn_relu(h, p["conv3_w"], p["conv3_b"], p["bn3"])
    n, c, l = h.shape
    i = np.arange(POOL_OUT)
    starts, ends = (i * l) // POOL_OUT, ((i + 1) * l + POOL_OUT - 1) // POOL_OUT
    out = np.empty((n, c, POOL_OUT))
    for j in range(POOL_OUT):
        out[:, :, j] = h[:, :, starts[j]:ends[j]].mean(axis=-1)
    return out


if __name__ == "__main__":
    key = jax.random.PRNGKey(0)
    k_in, k_par = jax.random.split(key)

    batch, length = 2, 32992            # L % 8 == 0; L/8 = 4124 -> pool to 2062
    x = jax.random.normal(k_in, (batch, 1, length), jnp.float32)       # NCW input
    params = init_params(k_par)
    enc = prepare_encoder(params)

    fwd = jax.jit(wav_encoder_fwd)
    y = jax.block_until_ready(fwd(enc, x))

    assert y.shape == (batch, 32, POOL_OUT), y.shape
    assert bool(jnp.all(jnp.isfinite(y)))
    # Numerical check vs. float64 NumPy reference (tolerance covers the MXU's
    # bf16-operand rounding of f32 matmuls at default precision).
    y_ref = _reference_forward(params, np.asarray(x))
    np.testing.assert_allclose(np.asarray(y), y_ref, atol=3e-2, rtol=3e-2)
    print("KERNEL_OK")
</pallas_src>

<mosaic_0001>
module attributes {stable_mosaic.version = 11 : i64} {
  func.func @_encoder_kernel(%arg0: i32, %arg1: i32, %arg2: memref<1x8x4736xf32, #tpu.memory_space<vmem>>, %arg3: memref<96x128xf32, #tpu.memory_space<vmem>>, %arg4: memref<1x32x512xf32, #tpu.memory_space<vmem>>) attributes {dimension_semantics = [#tpu.dimension_semantics<parallel>, #tpu.dimension_semantics<parallel>], iteration_bounds = array<i64: 2, 9>, scalar_prefetch = 0 : i64, scratch_operands = 0 : i64, tpu.core_type = #tpu.core_type<tc>, window_params = [{transform_indices = @transform_0, window_bounds = array<i64: 1, 8, 4736>}, {pipeline_mode = #tpu.pipeline_mode<synchronous>, transform_indices = @transform_1, window_bounds = array<i64: 96, 128>}, {transform_indices = @transform_2, window_bounds = array<i64: 1, 32, 512>}]} {
    %c512_i32 = arith.constant 512 : i32
    %0 = arith.muli %arg1, %c512_i32 : i32
    %1 = tpu.assume_multiple %0, 128 : i32
    %c0 = arith.constant 0 : index
    %c0_0 = arith.constant 0 : index
    %2 = arith.index_cast %1 : i32 to index
    %3 = vector.load %arg2[%c0, %c0_0, %2] : memref<1x8x4736xf32, #tpu.memory_space<vmem>>, vector<1x8x518xf32>
    %4 = vector.shape_cast %3 : vector<1x8x518xf32> to vector<8x518xf32>
    %c0_1 = arith.constant 0 : index
    %c0_2 = arith.constant 0 : index
    %5 = vector.load %arg3[%c0_1, %c0_2] : memref<96x128xf32, #tpu.memory_space<vmem>>, vector<96x128xf32>
    %6 = vector.extract_strided_slice %5 {offsets = [0, 0], sizes = [96, 8], strides = [1, 1]} : vector<96x128xf32> to vector<96x8xf32>
    %7 = vector.extract_strided_slice %5 {offsets = [0, 8], sizes = [96, 32], strides = [1, 1]} : vector<96x128xf32> to vector<96x32xf32>
    %8 = vector.extract_strided_slice %5 {offsets = [0, 40], sizes = [96, 32], strides = [1, 1]} : vector<96x128xf32> to vector<96x32xf32>
    %9 = vector.extract_strided_slice %5 {offsets = [0, 72], sizes = [32, 1], strides = [1, 1]} : vector<96x128xf32> to vector<32x1xf32>
    %10 = vector.extract_strided_slice %5 {offsets = [32, 72], sizes = [32, 1], strides = [1, 1]} : vector<96x128xf32> to vector<32x1xf32>
    %11 = vector.extract_strided_slice %5 {offsets = [64, 72], sizes = [32, 1], strides = [1, 1]} : vector<96x128xf32> to vector<32x1xf32>
    %12 = tpu.iota {dimensions = array<i32: 1>} : vector<1x518xi32>
    %c512_i32_3 = arith.constant 512 : i32
    %13 = arith.muli %arg1, %c512_i32_3 : i32
    %c3_i32 = arith.constant 3 : i32
    %14 = arith.subi %13, %c3_i32 : i32
    %15 = vector.broadcast %14 : i32 to vector<1x518xi32>
    %16 = arith.addi %12, %15 : vector<1x518xi32>
    %c0_i32 = arith.constant 0 : i32
    %17 = vector.broadcast %c0_i32 : i32 to vector<1x518xi32>
    %18 = arith.cmpi sge, %16, %17 : vector<1x518xi32>
    %c4124_i32 = arith.constant 4124 : i32
    %19 = vector.broadcast %c4124_i32 : i32 to vector<1x518xi32>
    %20 = arith.cmpi slt, %16, %19 : vector<1x518xi32>
    %21 = arith.andi %18, %20 : vector<1x518xi1>
    %22 = arith.extui %21 : vector<1x518xi1> to vector<1x518xi32>
    %23 = arith.sitofp %22 : vector<1x518xi32> to vector<1x518xf32>
    %cst = arith.constant dense<0.000000e+00> : vector<96x518xf32>
    %24 = tpu.matmul %6, %4, %cst {dimension_numbers = #tpu.dot_dimension_numbers<[1], [0], [0], [1], [0, 0, 1, 1], [], []>} : vector<96x8xf32>, vector<8x518xf32>, vector<96x518xf32> -> vector<96x518xf32>
    %25 = vector.extract_strided_slice %24 {offsets = [0, 0], sizes = [32, 516], strides = [1, 1]} : vector<96x518xf32> to vector<32x516xf32>
    %26 = vector.extract_strided_slice %24 {offsets = [32, 1], sizes = [32, 516], strides = [1, 1]} : vector<96x518xf32> to vector<32x516xf32>
    %27 = arith.addf %25, %26 : vector<32x516xf32>
    %28 = vector.extract_strided_slice %24 {offsets = [64, 2], sizes = [32, 516], strides = [1, 1]} : vector<96x518xf32> to vector<32x516xf32>
    %29 = arith.addf %27, %28 : vector<32x516xf32>
    %30 = vector.broadcast %9 : vector<32x1xf32> to vector<32x516xf32>
    %31 = arith.addf %29, %30 : vector<32x516xf32>
    %cst_4 = arith.constant 0.000000e+00 : f32
    %32 = vector.broadcast %cst_4 : f32 to vector<32x516xf32>
    %33 = arith.maximumf %31, %32 : vector<32x516xf32>
    %34 = vector.extract_strided_slice %23 {offsets = [0, 1], sizes = [1, 516], strides = [1, 1]} : vector<1x518xf32> to vector<1x516xf32>
    %35 = vector.broadcast %34 : vector<1x516xf32> to vector<32x516xf32>
    %36 = arith.mulf %33, %35 : vector<32x516xf32>
    %cst_5 = arith.constant dense<0.000000e+00> : vector<96x516xf32>
    %37 = tpu.matmul %7, %36, %cst_5 {dimension_numbers = #tpu.dot_dimension_numbers<[1], [0], [0], [1], [0, 0, 1, 1], [], []>} : vector<96x32xf32>, vector<32x516xf32>, vector<96x516xf32> -> vector<96x516xf32>
    %38 = vector.extract_strided_slice %37 {offsets = [0, 0], sizes = [32, 514], strides = [1, 1]} : vector<96x516xf32> to vector<32x514xf32>
    %39 = vector.extract_strided_slice %37 {offsets = [32, 1], sizes = [32, 514], strides = [1, 1]} : vector<96x516xf32> to vector<32x514xf32>
    %40 = arith.addf %38, %39 : vector<32x514xf32>
    %41 = vector.extract_strided_slice %37 {offsets = [64, 2], sizes = [32, 514], strides = [1, 1]} : vector<96x516xf32> to vector<32x514xf32>
    %42 = arith.addf %40, %41 : vector<32x514xf32>
    %43 = vector.broadcast %10 : vector<32x1xf32> to vector<32x514xf32>
    %44 = arith.addf %42, %43 : vector<32x514xf32>
    %cst_6 = arith.constant 0.000000e+00 : f32
    %45 = vector.broadcast %cst_6 : f32 to vector<32x514xf32>
    %46 = arith.maximumf %44, %45 : vector<32x514xf32>
    %47 = vector.extract_strided_slice %23 {offsets = [0, 2], sizes = [1, 514], strides = [1, 1]} : vector<1x518xf32> to vector<1x514xf32>
    %48 = vector.broadcast %47 : vector<1x514xf32> to vector<32x514xf32>
    %49 = arith.mulf %46, %48 : vector<32x514xf32>
    %cst_7 = arith.constant dense<0.000000e+00> : vector<96x514xf32>
    %50 = tpu.matmul %8, %49, %cst_7 {dimension_numbers = #tpu.dot_dimension_numbers<[1], [0], [0], [1], [0, 0, 1, 1], [], []>} : vector<96x32xf32>, vector<32x514xf32>, vector<96x514xf32> -> vector<96x514xf32>
    %51 = vector.extract_strided_slice %50 {offsets = [0, 0], sizes = [32, 512], strides = [1, 1]} : vector<96x514xf32> to vector<32x512xf32>
    %52 = vector.extract_strided_slice %50 {offsets = [32, 1], sizes = [32, 512], strides = [1, 1]} : vector<96x514xf32> to vector<32x512xf32>
    %53 = arith.addf %51, %52 : vector<32x512xf32>
    %54 = vector.extract_strided_slice %50 {offsets = [64, 2], sizes = [32, 512], strides = [1, 1]} : vector<96x514xf32> to vector<32x512xf32>
    %55 = arith.addf %53, %54 : vector<32x512xf32>
    %56 = vector.broadcast %11 : vector<32x1xf32> to vector<32x512xf32>
    %57 = arith.addf %55, %56 : vector<32x512xf32>
    %cst_8 = arith.constant 0.000000e+00 : f32
    %58 = vector.broadcast %cst_8 : f32 to vector<32x512xf32>
    %59 = arith.maximumf %57, %58 : vector<32x512xf32>
    %c0_9 = arith.constant 0 : index
    %c0_10 = arith.constant 0 : index
    %c0_11 = arith.constant 0 : index
    %60 = vector.load %arg4[%c0_9, %c0_10, %c0_11] : memref<1x32x512xf32, #tpu.memory_space<vmem>>, vector<1x32x512xf32>
    %61 = vector.shape_cast %60 : vector<1x32x512xf32> to vector<32x512xf32>
    %62 = vector.shape_cast %59 : vector<32x512xf32> to vector<1x32x512xf32>
    tpu.vector_store %arg4[%c0_9, %c0_10, %c0_11], %62 {strides = array<i32>} : memref<1x32x512xf32, #tpu.memory_space<vmem>>, vector<1x32x512xf32>,
    return
  }
  func.func @transform_0(%arg0: i32, %arg1: i32) -> (i32, i32, i32) {
    %c0_i32 = arith.constant 0 : i32
    %c0_i32_0 = arith.constant 0 : i32
    %c0_i32_1 = arith.constant 0 : i32
    return %arg0, %c0_i32, %c0_i32_0 : i32, i32, i32
  }
  func.func @transform_1(%arg0: i32, %arg1: i32) -> (i32, i32) {
    %c0_i32 = arith.constant 0 : i32
    %c0_i32_0 = arith.constant 0 : i32
    %c0_i32_1 = arith.constant 0 : i32
    return %c0_i32, %c0_i32_0 : i32, i32
  }
  func.func @transform_2(%arg0: i32, %arg1: i32) -> (i32, i32, i32) {
    %c0_i32 = arith.constant 0 : i32
    %c0_i32_0 = arith.constant 0 : i32
    return %arg0, %c0_i32, %arg1 : i32, i32, i32
  }
}

</mosaic_0001>

<llo_original>
// kernel: wav_encoder_fwd.1
$region0: #{wav_encoder_fwd.1}
  #allocation0 [shape = 'u32[]', space=smem, size = 0x4, offset = 0x4, fixed_abs, tag = 'smem constant byte address 0x4 - core index']
  #allocation1 [shape = 'u32[72,128]{1,0:T(1,128)}', space=vmem, size = 0x9000, scoped, tag = 'internal scratch']
  %s0 = inlined_call_operand.vmem [shape: f32[2,8,4736], index: 0, kind: input, shape index: {}]
  %s1 = inlined_call_operand.vmem [shape: f32[96,128], index: 1, kind: input, shape index: {}]
  %s2 = inlined_call_operand.vmem [shape: f32[2,32,4608], index: 2, kind: output, shape index: {}]
  %s3 = sld [smem:[#allocation0]]
  $region60: #{wav_encoder_fwd.1} parent=0
    _
  %s5 = ssub.s32 1, %s3
  %s6 = scalar_select 0, %s5, %s3
  $region1: #{wav_encoder_fwd.1} parent=0
    #allocation2 [shape = 'u8[131072]{0}', space=vmem, size = 0x20000, scoped, tag = 'output window, operand 0']
    loop: start=0, step=1, limit=20
    $region2: #{wav_encoder_fwd.1} parent=1 // loop_pre_header
      _
    $region3: #{wav_encoder_fwd.1} parent=1 // loop_header
      %s8 = sphi 0, %s12
      %p9 = scmp.ge.s32.totalorder %s8, 20
      %s15 = sphi 0, %s27
      %s16 = sphi 0, %s23
      %s17 = sphi 0, %s15
      %s18 = sphi 0, %s16
      %s19 = sphi 0, %s17
      %s20 = sphi 0, %s18
      %s30 = sphi 0, %s32
      %s33 = sphi 0, %s30
      %s34 = sphi 0, %s33
      %s50 = sphi 0, %s34
      %s54 = sphi 0, %s54
      %s56 = sphi 0, %s54
      %s57 = sphi 0, %s56
      %s71 = sphi 0, %s57
      %s79 = sphi 0, %s81
      %s82 = sphi 0, %s79
      %s83 = sphi 0, %s82
      %s99 = sphi 0, %s83
    $region4: #{wav_encoder_fwd.1} parent=1 // loop_header_branch
      %11 = sbr.rel (%p9) target = $region8
    $region5: #{wav_encoder_fwd.1} parent=1 // loop_body
      %s13 = ssub.s32 %s8, 1
      %s14 = ssub.s32 %s8, 2
      %s21 = sadd.s32 1, %s16
      %p22 = scmp.ge.s32.totalorder %s21, 9
      %s23 = scalar_select %p22, 0, %s21
      %s24 = sadd.s32 1, %s15
      %s25 = scalar_select %p22, %s24, %s15
      %p26 = scmp.ge.s32.totalorder %s25, 2
      %s27 = scalar_select %p26, 0, %s25
      %s28 = ssub.s32 %s15, %s27
      %p29 = scmp.eq.s32.totalorder %s28, 0
      %s31 = sadd.s32 %s30, 1
      %s32 = scalar_select %p29, %s30, %s31
      %p35 = pneg %p29
      %p36 = scmp.eq.s32.totalorder %s8, 17
      %p37 = por %p35, %p36
      %p38 = scmp.ne.s32.totalorder %s30, %s33
      %p39 = scmp.eq.s32.totalorder %s8, 0
      %p40 = por %p38, %p39
      %p41 = scmp.ne.s32.totalorder %s30, %s33
      %p42 = scmp.eq.s32.totalorder %s13, 17
      %p43 = por %p41, %p42
      %p44 = scmp.ne.s32.totalorder %s33, %s34
      %p45 = scmp.eq.s32.totalorder %s13, 0
      %p46 = por %p44, %p45
      %p47 = scmp.ne.s32.totalorder %s33, %s34
      %p48 = scmp.eq.s32.totalorder %s14, 17
      %p49 = por %p47, %p48
      %p51 = scmp.ne.s32.totalorder %s34, %s50
      %p52 = scmp.eq.s32.totalorder %s14, 0
      %p53 = por %p51, %p52
      %s55 = sadd.s32 %s54, 1
      %p58 = scmp.eq.s32.totalorder %s8, 17
      %p59 = scmp.ne.s32.totalorder %s54, %s56
      %p60 = scmp.eq.s32.totalorder %s8, 0
      %p61 = por %p59, %p60
      %p62 = scmp.ne.s32.totalorder %s54, %s56
      %p63 = scmp.eq.s32.totalorder %s13, 17
      %p64 = por %p62, %p63
      %p65 = scmp.ne.s32.totalorder %s56, %s57
      %p66 = scmp.eq.s32.totalorder %s13, 0
      %p67 = por %p65, %p66
      %p68 = scmp.ne.s32.totalorder %s56, %s57
      %p69 = scmp.eq.s32.totalorder %s14, 17
      %p70 = por %p68, %p69
      %p72 = scmp.ne.s32.totalorder %s57, %s71
      %p73 = scmp.eq.s32.totalorder %s14, 0
      %p74 = por %p72, %p73
      %s75 = ssub.s32 %s15, %s27
      %s76 = ssub.s32 %s16, %s23
      %s77 = sor.u32 %s75, %s76
      %p78 = scmp.eq.s32.totalorder %s77, 0
      %s80 = sadd.s32 %s79, 1
      %s81 = scalar_select %p78, %s79, %s80
      %p84 = pneg %p78
      %p85 = scmp.eq.s32.totalorder %s8, 17
      %p86 = por %p84, %p85
      %p87 = scmp.ne.s32.totalorder %s79, %s82
      %p88 = scmp.eq.s32.totalorder %s8, 0
      %p89 = por %p87, %p88
      %p90 = scmp.ne.s32.totalorder %s79, %s82
      %p91 = scmp.eq.s32.totalorder %s13, 17
      %p92 = por %p90, %p91
      %p93 = scmp.ne.s32.totalorder %s82, %s83
      %p94 = scmp.eq.s32.totalorder %s13, 0
      %p95 = por %p93, %p94
      %p96 = scmp.ne.s32.totalorder %s82, %s83
      %p97 = scmp.eq.s32.totalorder %s14, 17
      %p98 = por %p96, %p97
      %p100 = scmp.ne.s32.totalorder %s83, %s99
      %p101 = scmp.eq.s32.totalorder %s14, 0
      %p102 = por %p100, %p101
      %p103 = scmp.le.s32.totalorder 1, %s8
      %p104 = scmp.lt.s32.totalorder %s8, 19
      %p105 = pnand %p103, %p104
      %p106 = pneg %p105
      // Predicated region
      $region9: #{wav_encoder_fwd.1} parent=5 // pred_check
        _
      $region10: #{wav_encoder_fwd.1} parent=5 // pred_check_branch
        %108 = sbr.rel (%p105) target = $region12
      $region11: #{wav_encoder_fwd.1} parent=5 // pred_region
        %s109 = ssub.s32 %s8, 1
        // Predicated region
        $region13: #{wav_encoder_fwd.1} parent=11 // pred_check
          %p110 = pneg %p67
        $region14: #{wav_encoder_fwd.1} parent=11 // pred_check_branch
          %112 = sbr.rel (%p110) target = $region16
        $region15: #{wav_encoder_fwd.1} parent=11 // pred_region
          _
        $region16: #{wav_encoder_fwd.1} parent=11 // pred_fallthru
          _
      $region12: #{wav_encoder_fwd.1} parent=5 // pred_fallthru
        _
      %p113 = scmp.lt.s32.totalorder %s8, 18
      // Predicated region
      $region17: #{wav_encoder_fwd.1} parent=5 // pred_check
        %p114 = pneg %p113
      $region18: #{wav_encoder_fwd.1} parent=5 // pred_check_branch
        %116 = sbr.rel (%p114) target = $region20
      $region19: #{wav_encoder_fwd.1} parent=5 // pred_region
        // Predicated region
        $region21: #{wav_encoder_fwd.1} parent=19 // pred_check
          %p117 = pneg %p40
        $region22: #{wav_encoder_fwd.1} parent=19 // pred_check_branch
          %119 = sbr.rel (%p117) target = $region24
        $region23: #{wav_encoder_fwd.1} parent=19 // pred_region
          %p120 = scmp.lt.s32.totalorder %s15, 1
          %s121 = scalar_select %p120, %s15, 1
          %s122 = smul.addr %s121, 37
          %s123 = smul.addr %s122, 8
          %s124 = scalar_lea.vmem %s0, %s123
        $region24: #{wav_encoder_fwd.1} parent=19 // pred_fallthru
          _
      $region20: #{wav_encoder_fwd.1} parent=5 // pred_fallthru
        _
      %p125 = scmp.le.s32.totalorder 1, %s8
      %p126 = scmp.lt.s32.totalorder %s8, 19
      %p127 = pnand %p125, %p126
      %p128 = pneg %p127
      // Predicated region
      $region25: #{wav_encoder_fwd.1} parent=5 // pred_check
        _
      $region26: #{wav_encoder_fwd.1} parent=5 // pred_check_branch
        %130 = sbr.rel (%p127) target = $region28
      $region27: #{wav_encoder_fwd.1} parent=5 // pred_region
        %s131 = ssub.s32 %s8, 1
        %p132 = scmp.lt.s32.totalorder %s17, 1
        %s133 = scalar_select %p132, %s17, 1
        %s134 = smul.addr %s133, 37
        %s135 = smul.addr %s134, 8
        %s136 = scalar_lea.vmem %s0, %s135
        %p137 = pneg %p46
        %p138 = pneg %p43
        %p139 = pneg %p67
        %p140 = pneg %p64
        %p141 = pneg %p95
        %p142 = pneg %p92
        %s143 = sand.u32 %s82, 1
        %s144 = sand.u32 %s82, 1
        %s145 = smul.addr %s144, 128
        %s146 = scalar_lea.vmem [#allocation2], %s145
        %p147 = scmp.lt.s32.totalorder %s17, 1
        %s148 = scalar_select %p147, %s17, 1
        %s149 = smul.addr %s148, 37
        %s150 = smul.addr %s149, 8
        %s151 = scalar_lea.vmem %s0, %s150
        %s152 = smul.u32 4, %s18
        %s153 = smul.u32 %s18, 512
        %s154 = sshra.s32 %s153, 7
        %s155 = sand.u32 %s153, 127
        %s156 = smul.addr %s154, 8
        %s157 = scalar_lea.vmem %s151, %s156
        %v158 = vld [vmem:[%s157] sm:$0xff]
        %v159 = vld [vmem:[%s157 + $0x8] sm:$0xff]
        %v160 = vld [vmem:[%s157 + $0x10] sm:$0xff]
        %v161 = vld [vmem:[%s157 + $0x18] sm:$0xff]
        %v162 = vld [vmem:[%s157 + $0x20] sm:$0xff]
        %v163 = vld [vmem:[%s1] sm:$0xff]
        %v164 = vld [vmem:[%s1 + $0x8] sm:$0xff]
        %v165 = vld [vmem:[%s1 + $0x10] sm:$0xff]
        %v166 = vld [vmem:[%s1 + $0x18] sm:$0xff]
        %v167 = vld [vmem:[%s1 + $0x20] sm:$0xff]
        %v168 = vld [vmem:[%s1 + $0x28] sm:$0xff]
        %v169 = vld [vmem:[%s1 + $0x30] sm:$0xff]
        %v170 = vld [vmem:[%s1 + $0x38] sm:$0xff]
        %v171 = vld [vmem:[%s1 + $0x40] sm:$0xff]
        %v172 = vld [vmem:[%s1 + $0x48] sm:$0xff]
        %v173 = vld [vmem:[%s1 + $0x50] sm:$0xff]
        %v174 = vld [vmem:[%s1 + $0x58] sm:$0xff]
        %v175 = vlaneseq
        %v176 = vand.u32 %v175, 127
        %v177 = vadd.s32 %v176, 128
        %v178 = vadd.s32 %v176, 256
        %v179 = vadd.s32 %v176, 384
        %v180 = vadd.s32 %v176, 512
        %s181 = ssub.s32 %s153, 3
        %v182 = vstv %s181
        %v183 = vadd.s32 %v176, %v182
        %v184 = vadd.s32 %v177, %v182
        %v185 = vadd.s32 %v178, %v182
        %v186 = vadd.s32 %v179, %v182
        %v187 = vadd.s32 %v180, %v182
        %vm188 = vcmp.ge.s32.totalorder %v183, 0
        %vm189 = vcmp.ge.s32.totalorder %v184, 0
        %vm190 = vcmp.ge.s32.totalorder %v185, 0
        %vm191 = vcmp.ge.s32.totalorder %v186, 0
        %vm192 = vcmp.ge.s32.totalorder %v187, 0
        %vm193 = vcmp.lt.s32.totalorder %v183, 4124
        %vm194 = vcmp.lt.s32.totalorder %v184, 4124
        %vm195 = vcmp.lt.s32.totalorder %v185, 4124
        %vm196 = vcmp.lt.s32.totalorder %v186, 4124
        %vm197 = vcmp.lt.s32.totalorder %v187, 4124
        %vm198 = vmand %vm188, %vm193
        %vm199 = vmand %vm189, %vm194
        %vm200 = vmand %vm190, %vm195
        %vm201 = vmand %vm191, %vm196
        %vm202 = vmand %vm192, %vm197
        %v203 = vsel %vm198, 1, 0
        %v204 = vsel %vm199, 1, 0
        %v205 = vsel %vm200, 1, 0
        %v206 = vsel %vm201, 1, 0
        %v207 = vsel %vm202, 1, 0
        %v208 = vcvt.s32.f32 %v203
        %v209 = vcvt.s32.f32 %v204
        %v210 = vcvt.s32.f32 %v205
        %v211 = vcvt.s32.f32 %v206
        %v212 = vcvt.s32.f32 %v207
        %vm213 = vcmask 64512
        %v215 = vsel %vm213, %v163, 0
        %v218 = vsel %vm213, %v164, 0
        %v221 = vsel %vm213, %v165, 0
        %v224 = vsel %vm213, %v166, 0
        %v227 = vsel %vm213, %v167, 0
        %v230 = vsel %vm213, %v168, 0
        %v233 = vsel %vm213, %v169, 0
        %v236 = vsel %vm213, %v170, 0
        %v239 = vsel %vm213, %v171, 0
        %v242 = vsel %vm213, %v172, 0
        %v245 = vsel %vm213, %v173, 0
        %v248 = vsel %vm213, %v174, 0
        %250 = vmatpush.msra.mxu0 0.0
        %251 = vmatpush.msra.mxu0 0.0
        %252 = vmatpush.msra.mxu0 0.0
        %253 = vmatpush.msra.mxu0 0.0
        %254 = vmatpush.msra.mxu0 0.0
        %255 = vmatpush.msra.mxu0 0.0
        %256 = vmatpush.msra.mxu0 0.0
        %257 = vmatpush.msra.mxu0 0.0
        %258 = vmatpush.msra.mxu0 0.0
        %259 = vmatpush.msra.mxu0 0.0
        %260 = vmatpush.msra.mxu0 0.0
        %261 = vmatpush.msra.mxu0 0.0
        %262 = vmatpush.msra.mxu0 0.0
        %263 = vmatpush.msra.mxu0 0.0
        %264 = vmatpush.msra.mxu0 0.0
        %265 = vmatpush.msra.mxu0 %v158
        %266 = vmatmul.f32.gmra.mxu0 %v215
        %v267 = vpop.f32.mrf.mxu0
        %v268 = vadd.f32 0.0, %v267
        %269 = vmatmul.f32.gmra.mxu0 %v218
        %v270 = vpop.f32.mrf.mxu0
        %v271 = vadd.f32 0.0, %v270
        %272 = vmatmul.f32.gmra.mxu0 %v221
        %v273 = vpop.f32.mrf.mxu0
        %v274 = vadd.f32 0.0, %v273
        %275 = vmatmul.f32.gmra.mxu0 %v224
        %v276 = vpop.f32.mrf.mxu0
        %v277 = vadd.f32 0.0, %v276
        %278 = vmatmul.f32.gmra.mxu0 %v227
        %v279 = vpop.f32.mrf.mxu0
        %v280 = vadd.f32 0.0, %v279
        %281 = vmatmul.f32.gmra.mxu0 %v230
        %v282 = vpop.f32.mrf.mxu0
        %v283 = vadd.f32 0.0, %v282
        %284 = vmatmul.f32.gmra.mxu0 %v233
        %v285 = vpop.f32.mrf.mxu0
        %v286 = vadd.f32 0.0, %v285
        %287 = vmatmul.f32.gmra.mxu0 %v236
        %v288 = vpop.f32.mrf.mxu0
        %v289 = vadd.f32 0.0, %v288
        %290 = vmatmul.f32.gmra.mxu0 %v239
        %v291 = vpop.f32.mrf.mxu0
        %v292 = vadd.f32 0.0, %v291
        %293 = vmatmul.f32.gmra.mxu0 %v242
        %v294 = vpop.f32.mrf.mxu0
        %v295 = vadd.f32 0.0, %v294
        %296 = vmatmul.f32.gmra.mxu0 %v245
        %v297 = vpop.f32.mrf.mxu0
        %v298 = vadd.f32 0.0, %v297
        %299 = vmatmul.f32.gmra.mxu0 %v248
        %v300 = vpop.f32.mrf.mxu0
        %v301 = vadd.f32 0.0, %v300
        %302 = vdwg.mxu0
        %303 = vmatpush.msra.mxu0 0.0
        %304 = vmatpush.msra.mxu0 0.0
        %305 = vmatpush.msra.mxu0 0.0
        %306 = vmatpush.msra.mxu0 0.0
        %307 = vmatpush.msra.mxu0 0.0
        %308 = vmatpush.msra.mxu0 0.0
        %309 = vmatpush.msra.mxu0 0.0
        %310 = vmatpush.msra.mxu0 0.0
        %311 = vmatpush.msra.mxu0 0.0
        %312 = vmatpush.msra.mxu0 0.0
        %313 = vmatpush.msra.mxu0 0.0
        %314 = vmatpush.msra.mxu0 0.0
        %315 = vmatpush.msra.mxu0 0.0
        %316 = vmatpush.msra.mxu0 0.0
        %317 = vmatpush.msra.mxu0 0.0
        %318 = vmatpush.msra.mxu0 %v159
        %319 = vmatmul.f32.gmra.mxu0 %v215
        %v320 = vpop.f32.mrf.mxu0
        %v321 = vadd.f32 0.0, %v320
        %322 = vmatmul.f32.gmra.mxu0 %v218
        %v323 = vpop.f32.mrf.mxu0
        %v324 = vadd.f32 0.0, %v323
        %325 = vmatmul.f32.gmra.mxu0 %v221
        %v326 = vpop.f32.mrf.mxu0
        %v327 = vadd.f32 0.0, %v326
        %328 = vmatmul.f32.gmra.mxu0 %v224
        %v329 = vpop.f32.mrf.mxu0
        %v330 = vadd.f32 0.0, %v329
        %331 = vmatmul.f32.gmra.mxu0 %v227
        %v332 = vpop.f32.mrf.mxu0
        %v333 = vadd.f32 0.0, %v332
        %334 = vmatmul.f32.gmra.mxu0 %v230
        %v335 = vpop.f32.mrf.mxu0
        %v336 = vadd.f32 0.0, %v335
        %337 = vmatmul.f32.gmra.mxu0 %v233
        %v338 = vpop.f32.mrf.mxu0
        %v339 = vadd.f32 0.0, %v338
        %340 = vmatmul.f32.gmra.mxu0 %v236
        %v341 = vpop.f32.mrf.mxu0
        %v342 = vadd.f32 0.0, %v341
        %343 = vmatmul.f32.gmra.mxu0 %v239
        %v344 = vpop.f32.mrf.mxu0
        %v345 = vadd.f32 0.0, %v344
        %346 = vmatmul.f32.gmra.mxu0 %v242
        %v347 = vpop.f32.mrf.mxu0
        %v348 = vadd.f32 0.0, %v347
        %349 = vmatmul.f32.gmra.mxu0 %v245
        %v350 = vpop.f32.mrf.mxu0
        %v351 = vadd.f32 0.0, %v350
        %352 = vmatmul.f32.gmra.mxu0 %v248
        %v353 = vpop.f32.mrf.mxu0
        %v354 = vadd.f32 0.0, %v353
        %355 = vdwg.mxu0
        %356 = vmatpush.msra.mxu0 0.0
        %357 = vmatpush.msra.mxu0 0.0
        %358 = vmatpush.msra.mxu0 0.0
        %359 = vmatpush.msra.mxu0 0.0
        %360 = vmatpush.msra.mxu0 0.0
        %361 = vmatpush.msra.mxu0 0.0
        %362 = vmatpush.msra.mxu0 0.0
        %363 = vmatpush.msra.mxu0 0.0
        %364 = vmatpush.msra.mxu0 0.0
        %365 = vmatpush.msra.mxu0 0.0
        %366 = vmatpush.msra.mxu0 0.0
        %367 = vmatpush.msra.mxu0 0.0
        %368 = vmatpush.msra.mxu0 0.0
        %369 = vmatpush.msra.mxu0 0.0
        %370 = vmatpush.msra.mxu0 0.0
        %371 = vmatpush.msra.mxu0 %v160
        %372 = vmatmul.f32.gmra.mxu0 %v215
        %v373 = vpop.f32.mrf.mxu0
        %v374 = vadd.f32 0.0, %v373
        %375 = vmatmul.f32.gmra.mxu0 %v218
        %v376 = vpop.f32.mrf.mxu0
        %v377 = vadd.f32 0.0, %v376
        %378 = vmatmul.f32.gmra.mxu0 %v221
        %v379 = vpop.f32.mrf.mxu0
        %v380 = vadd.f32 0.0, %v379
        %381 = vmatmul.f32.gmra.mxu0 %v224
        %v382 = vpop.f32.mrf.mxu0
        %v383 = vadd.f32 0.0, %v382
        %384 = vmatmul.f32.gmra.mxu0 %v227
        %v385 = vpop.f32.mrf.mxu0
        %v386 = vadd.f32 0.0, %v385
        %387 = vmatmul.f32.gmra.mxu0 %v230
        %v388 = vpop.f32.mrf.mxu0
        %v389 = vadd.f32 0.0, %v388
        %390 = vmatmul.f32.gmra.mxu0 %v233
        %v391 = vpop.f32.mrf.mxu0
        %v392 = vadd.f32 0.0, %v391
        %393 = vmatmul.f32.gmra.mxu0 %v236
        %v394 = vpop.f32.mrf.mxu0
        %v395 = vadd.f32 0.0, %v394
        %396 = vmatmul.f32.gmra.mxu0 %v239
        %v397 = vpop.f32.mrf.mxu0
        %v398 = vadd.f32 0.0, %v397
        %399 = vmatmul.f32.gmra.mxu0 %v242
        %v400 = vpop.f32.mrf.mxu0
        %v401 = vadd.f32 0.0, %v400
        %402 = vmatmul.f32.gmra.mxu0 %v245
        %v403 = vpop.f32.mrf.mxu0
        %v404 = vadd.f32 0.0, %v403
        %405 = vmatmul.f32.gmra.mxu0 %v248
        %v406 = vpop.f32.mrf.mxu0
        %v407 = vadd.f32 0.0, %v406
        %408 = vdwg.mxu0
        %409 = vmatpush.msra.mxu0 0.0
        %410 = vmatpush.msra.mxu0 0.0
        %411 = vmatpush.msra.mxu0 0.0
        %412 = vmatpush.msra.mxu0 0.0
        %413 = vmatpush.msra.mxu0 0.0
        %414 = vmatpush.msra.mxu0 0.0
        %415 = vmatpush.msra.mxu0 0.0
        %416 = vmatpush.msra.mxu0 0.0
        %417 = vmatpush.msra.mxu0 0.0
        %418 = vmatpush.msra.mxu0 0.0
        %419 = vmatpush.msra.mxu0 0.0
        %420 = vmatpush.msra.mxu0 0.0
        %421 = vmatpush.msra.mxu0 0.0
        %422 = vmatpush.msra.mxu0 0.0
        %423 = vmatpush.msra.mxu0 0.0
        %424 = vmatpush.msra.mxu0 %v161
        %425 = vmatmul.f32.gmra.mxu0 %v215
        %v426 = vpop.f32.mrf.mxu0
        %v427 = vadd.f32 0.0, %v426
        %428 = vmatmul.f32.gmra.mxu0 %v218
        %v429 = vpop.f32.mrf.mxu0
        %v430 = vadd.f32 0.0, %v429
        %431 = vmatmul.f32.gmra.mxu0 %v221
        %v432 = vpop.f32.mrf.mxu0
        %v433 = vadd.f32 0.0, %v432
        %434 = vmatmul.f32.gmra.mxu0 %v224
        %v435 = vpop.f32.mrf.mxu0
        %v436 = vadd.f32 0.0, %v435
        %437 = vmatmul.f32.gmra.mxu0 %v227
        %v438 = vpop.f32.mrf.mxu0
        %v439 = vadd.f32 0.0, %v438
        %440 = vmatmul.f32.gmra.mxu0 %v230
        %v441 = vpop.f32.mrf.mxu0
        %v442 = vadd.f32 0.0, %v441
        %443 = vmatmul.f32.gmra.mxu0 %v233
        %v444 = vpop.f32.mrf.mxu0
        %v445 = vadd.f32 0.0, %v444
        %446 = vmatmul.f32.gmra.mxu0 %v236
        %v447 = vpop.f32.mrf.mxu0
        %v448 = vadd.f32 0.0, %v447
        %449 = vmatmul.f32.gmra.mxu0 %v239
        %v450 = vpop.f32.mrf.mxu0
        %v451 = vadd.f32 0.0, %v450
        %452 = vmatmul.f32.gmra.mxu0 %v242
        %v453 = vpop.f32.mrf.mxu0
        %v454 = vadd.f32 0.0, %v453
        %455 = vmatmul.f32.gmra.mxu0 %v245
        %v456 = vpop.f32.mrf.mxu0
        %v457 = vadd.f32 0.0, %v456
        %458 = vmatmul.f32.gmra.mxu0 %v248
        %v459 = vpop.f32.mrf.mxu0
        %v460 = vadd.f32 0.0, %v459
        %461 = vdwg.mxu0
        %462 = vmatpush.msra.mxu0 0.0
        %463 = vmatpush.msra.mxu0 0.0
        %464 = vmatpush.msra.mxu0 0.0
        %465 = vmatpush.msra.mxu0 0.0
        %466 = vmatpush.msra.mxu0 0.0
        %467 = vmatpush.msra.mxu0 0.0
        %468 = vmatpush.msra.mxu0 0.0
        %469 = vmatpush.msra.mxu0 0.0
        %470 = vmatpush.msra.mxu0 0.0
        %471 = vmatpush.msra.mxu0 0.0
        %472 = vmatpush.msra.mxu0 0.0
        %473 = vmatpush.msra.mxu0 0.0
        %474 = vmatpush.msra.mxu0 0.0
        %475 = vmatpush.msra.mxu0 0.0
        %476 = vmatpush.msra.mxu0 0.0
        %477 = vmatpush.msra.mxu0 %v162
        %478 = vmatmul.f32.gmra.mxu0 %v215
        %v479 = vpop.f32.mrf.mxu0
        %v480 = vadd.f32 0.0, %v479
        %481 = vmatmul.f32.gmra.mxu0 %v218
        %v482 = vpop.f32.mrf.mxu0
        %v483 = vadd.f32 0.0, %v482
        %484 = vmatmul.f32.gmra.mxu0 %v221
        %v485 = vpop.f32.mrf.mxu0
        %v486 = vadd.f32 0.0, %v485
        %487 = vmatmul.f32.gmra.mxu0 %v224
        %v488 = vpop.f32.mrf.mxu0
        %v489 = vadd.f32 0.0, %v488
        %490 = vmatmul.f32.gmra.mxu0 %v227
        %v491 = vpop.f32.mrf.mxu0
        %v492 = vadd.f32 0.0, %v491
        %493 = vmatmul.f32.gmra.mxu0 %v230
        %v494 = vpop.f32.mrf.mxu0
        %v495 = vadd.f32 0.0, %v494
        %496 = vmatmul.f32.gmra.mxu0 %v233
        %v497 = vpop.f32.mrf.mxu0
        %v498 = vadd.f32 0.0, %v497
        %499 = vmatmul.f32.gmra.mxu0 %v236
        %v500 = vpop.f32.mrf.mxu0
        %v501 = vadd.f32 0.0, %v500
        %502 = vmatmul.f32.gmra.mxu0 %v239
        %v503 = vpop.f32.mrf.mxu0
        %v504 = vadd.f32 0.0, %v503
        %505 = vmatmul.f32.gmra.mxu0 %v242
        %v506 = vpop.f32.mrf.mxu0
        %v507 = vadd.f32 0.0, %v506
        %508 = vmatmul.f32.gmra.mxu0 %v245
        %v509 = vpop.f32.mrf.mxu0
        %v510 = vadd.f32 0.0, %v509
        %511 = vmatmul.f32.gmra.mxu0 %v248
        %v512 = vpop.f32.mrf.mxu0
        %v513 = vadd.f32 0.0, %v512
        %514 = vdwg.mxu0
        %535 = vrot.lane.b32.xlu0 %v280, 127
        %v536 = vpop.permute.xlu0 %535
        %537 = vrot.lane.b32.xlu0 %v333, 127
        %v538 = vpop.permute.xlu0 %537
        %539 = vrot.lane.b32.xlu0 %v386, 127
        %v540 = vpop.permute.xlu0 %539
        %541 = vrot.lane.b32.xlu0 %v439, 127
        %v542 = vpop.permute.xlu0 %541
        %543 = vrot.lane.b32.xlu0 %v492, 127
        %v544 = vpop.permute.xlu0 %543
        %545 = vrot.lane.b32.xlu0 %v283, 127
        %v546 = vpop.permute.xlu0 %545
        %547 = vrot.lane.b32.xlu0 %v336, 127
        %v548 = vpop.permute.xlu0 %547
        %549 = vrot.lane.b32.xlu0 %v389, 127
        %v550 = vpop.permute.xlu0 %549
        %551 = vrot.lane.b32.xlu0 %v442, 127
        %v552 = vpop.permute.xlu0 %551
        %553 = vrot.lane.b32.xlu0 %v495, 127
        %v554 = vpop.permute.xlu0 %553
        %555 = vrot.lane.b32.xlu0 %v286, 127
        %v556 = vpop.permute.xlu0 %555
        %557 = vrot.lane.b32.xlu0 %v339, 127
        %v558 = vpop.permute.xlu0 %557
        %559 = vrot.lane.b32.xlu0 %v392, 127
        %v560 = vpop.permute.xlu0 %559
        %561 = vrot.lane.b32.xlu0 %v445, 127
        %v562 = vpop.permute.xlu0 %561
        %563 = vrot.lane.b32.xlu0 %v498, 127
        %v564 = vpop.permute.xlu0 %563
        %565 = vrot.lane.b32.xlu0 %v289, 127
        %v566 = vpop.permute.xlu0 %565
        %567 = vrot.lane.b32.xlu0 %v342, 127
        %v568 = vpop.permute.xlu0 %567
        %569 = vrot.lane.b32.xlu0 %v395, 127
        %v570 = vpop.permute.xlu0 %569
        %571 = vrot.lane.b32.xlu0 %v448, 127
        %v572 = vpop.permute.xlu0 %571
        %573 = vrot.lane.b32.xlu0 %v501, 127
        %v574 = vpop.permute.xlu0 %573
        %vm575 = vcmask 1039360
        %v576 = vsel %vm575, %v536, %v538
        %v577 = vsel %vm575, %v538, %v540
        %v578 = vsel %vm575, %v540, %v542
        %v579 = vsel %vm575, %v542, %v544
        %v580 = vsel %vm575, %v546, %v548
        %v581 = vsel %vm575, %v548, %v550
        %v582 = vsel %vm575, %v550, %v552
        %v583 = vsel %vm575, %v552, %v554
        %v584 = vsel %vm575, %v556, %v558
        %v585 = vsel %vm575, %v558, %v560
        %v586 = vsel %vm575, %v560, %v562
        %v587 = vsel %vm575, %v562, %v564
        %v588 = vsel %vm575, %v566, %v568
        %v589 = vsel %vm575, %v568, %v570
        %v590 = vsel %vm575, %v570, %v572
        %v591 = vsel %vm575, %v572, %v574
        %v612 = vadd.f32 %v268, %v576
        %v613 = vadd.f32 %v321, %v577
        %v614 = vadd.f32 %v374, %v578
        %v615 = vadd.f32 %v427, %v579
        %v616 = vadd.f32 %v480, %v544
        %v617 = vadd.f32 %v271, %v580
        %v618 = vadd.f32 %v324, %v581
        %v619 = vadd.f32 %v377, %v582
        %v620 = vadd.f32 %v430, %v583
        %v621 = vadd.f32 %v483, %v554
        %v622 = vadd.f32 %v274, %v584
        %v623 = vadd.f32 %v327, %v585
        %v624 = vadd.f32 %v380, %v586
        %v625 = vadd.f32 %v433, %v587
        %v626 = vadd.f32 %v486, %v564
        %v627 = vadd.f32 %v277, %v588
        %v628 = vadd.f32 %v330, %v589
        %v629 = vadd.f32 %v383, %v590
        %v630 = vadd.f32 %v436, %v591
        %v631 = vadd.f32 %v489, %v574
        %652 = vrot.lane.b32.xlu0 %v292, 126
        %v653 = vpop.permute.xlu0 %652
        %654 = vrot.lane.b32.xlu0 %v345, 126
        %v655 = vpop.permute.xlu0 %654
        %656 = vrot.lane.b32.xlu0 %v398, 126
        %v657 = vpop.permute.xlu0 %656
        %658 = vrot.lane.b32.xlu0 %v451, 126
        %v659 = vpop.permute.xlu0 %658
        %660 = vrot.lane.b32.xlu0 %v504, 126
        %v661 = vpop.permute.xlu0 %660
        %662 = vrot.lane.b32.xlu0 %v295, 126
        %v663 = vpop.permute.xlu0 %662
        %664 = vrot.lane.b32.xlu0 %v348, 126
        %v665 = vpop.permute.xlu0 %664
        %666 = vrot.lane.b32.xlu0 %v401, 126
        %v667 = vpop.permute.xlu0 %666
        %668 = vrot.lane.b32.xlu0 %v454, 126
        %v669 = vpop.permute.xlu0 %668
        %670 = vrot.lane.b32.xlu0 %v507, 126
        %v671 = vpop.permute.xlu0 %670
        %672 = vrot.lane.b32.xlu0 %v298, 126
        %v673 = vpop.permute.xlu0 %672
        %674 = vrot.lane.b32.xlu0 %v351, 126
        %v675 = vpop.permute.xlu0 %674
        %676 = vrot.lane.b32.xlu0 %v404, 126
        %v677 = vpop.permute.xlu0 %676
        %678 = vrot.lane.b32.xlu0 %v457, 126
        %v679 = vpop.permute.xlu0 %678
        %680 = vrot.lane.b32.xlu0 %v510, 126
        %v681 = vpop.permute.xlu0 %680
        %682 = vrot.lane.b32.xlu0 %v301, 126
        %v683 = vpop.permute.xlu0 %682
        %684 = vrot.lane.b32.xlu0 %v354, 126
        %v685 = vpop.permute.xlu0 %684
        %686 = vrot.lane.b32.xlu0 %v407, 126
        %v687 = vpop.permute.xlu0 %686
        %688 = vrot.lane.b32.xlu0 %v460, 126
        %v689 = vpop.permute.xlu0 %688
        %690 = vrot.lane.b32.xlu0 %v513, 126
        %v691 = vpop.permute.xlu0 %690
        %vm692 = vcmask 1031168
        %v693 = vsel %vm692, %v653, %v655
        %v694 = vsel %vm692, %v655, %v657
        %v695 = vsel %vm692, %v657, %v659
        %v696 = vsel %vm692, %v659, %v661
        %v697 = vsel %vm692, %v663, %v665
        %v698 = vsel %vm692, %v665, %v667
        %v699 = vsel %vm692, %v667, %v669
        %v700 = vsel %vm692, %v669, %v671
        %v701 = vsel %vm692, %v673, %v675
        %v702 = vsel %vm692, %v675, %v677
        %v703 = vsel %vm692, %v677, %v679
        %v704 = vsel %vm692, %v679, %v681
        %v705 = vsel %vm692, %v683, %v685
        %v706 = vsel %vm692, %v685, %v687
        %v707 = vsel %vm692, %v687, %v689
        %v708 = vsel %vm692, %v689, %v691
        %v729 = vadd.f32 %v612, %v693
        %v730 = vadd.f32 %v613, %v694
        %v731 = vadd.f32 %v614, %v695
        %v732 = vadd.f32 %v615, %v696
        %v733 = vadd.f32 %v616, %v661
        %v734 = vadd.f32 %v617, %v697
        %v735 = vadd.f32 %v618, %v698
        %v736 = vadd.f32 %v619, %v699
        %v737 = vadd.f32 %v620, %v700
        %v738 = vadd.f32 %v621, %v671
        %v739 = vadd.f32 %v622, %v701
        %v740 = vadd.f32 %v623, %v702
        %v741 = vadd.f32 %v624, %v703
        %v742 = vadd.f32 %v625, %v704
        %v743 = vadd.f32 %v626, %v681
        %v744 = vadd.f32 %v627, %v705
        %v745 = vadd.f32 %v628, %v706
        %v746 = vadd.f32 %v629, %v707
        %v747 = vadd.f32 %v630, %v708
        %v748 = vadd.f32 %v631, %v691
        %749 = vset.pattern.permute.xlu0 72
        %750 = vperm.xlu0 %749, %v163
        %v751 = vpop.permute.xlu0 %750
        %753 = vset.pattern.permute.xlu0 72
        %754 = vperm.xlu0 %753, %v164
        %v755 = vpop.permute.xlu0 %754
        %757 = vset.pattern.permute.xlu0 72
        %758 = vperm.xlu0 %757, %v165
        %v759 = vpop.permute.xlu0 %758
        %761 = vset.pattern.permute.xlu0 72
        %762 = vperm.xlu0 %761, %v166
        %v763 = vpop.permute.xlu0 %762
        %v765 = vadd.f32 %v729, %v751
        %v766 = vadd.f32 %v730, %v751
        %v767 = vadd.f32 %v731, %v751
        %v768 = vadd.f32 %v732, %v751
        %v769 = vadd.f32 %v733, %v751
        %v770 = vadd.f32 %v734, %v755
        %v771 = vadd.f32 %v735, %v755
        %v772 = vadd.f32 %v736, %v755
        %v773 = vadd.f32 %v737, %v755
        %v774 = vadd.f32 %v738, %v755
        %v775 = vadd.f32 %v739, %v759
        %v776 = vadd.f32 %v740, %v759
        %v777 = vadd.f32 %v741, %v759
        %v778 = vadd.f32 %v742, %v759
        %v779 = vadd.f32 %v743, %v759
        %v780 = vadd.f32 %v744, %v763
        %v781 = vadd.f32 %v745, %v763
        %v782 = vadd.f32 %v746, %v763
        %v783 = vadd.f32 %v747, %v763
        %v784 = vadd.f32 %v748, %v763
        %v785 = vmax.f32 %v765, 0.0
        %v786 = vmax.f32 %v766, 0.0
        %v787 = vmax.f32 %v767, 0.0
        %v788 = vmax.f32 %v768, 0.0
        %v789 = vmax.f32 %v769, 0.0
        %v790 = vmax.f32 %v770, 0.0
        %v791 = vmax.f32 %v771, 0.0
        %v792 = vmax.f32 %v772, 0.0
        %v793 = vmax.f32 %v773, 0.0
        %v794 = vmax.f32 %v774, 0.0
        %v795 = vmax.f32 %v775, 0.0
        %v796 = vmax.f32 %v776, 0.0
        %v797 = vmax.f32 %v777, 0.0
        %v798 = vmax.f32 %v778, 0.0
        %v799 = vmax.f32 %v779, 0.0
        %v800 = vmax.f32 %v780, 0.0
        %v801 = vmax.f32 %v781, 0.0
        %v802 = vmax.f32 %v782, 0.0
        %v803 = vmax.f32 %v783, 0.0
        %v804 = vmax.f32 %v784, 0.0
        %810 = vrot.lane.b32.xlu0 %v208, 127
        %v811 = vpop.permute.xlu0 %810
        %812 = vrot.lane.b32.xlu0 %v209, 127
        %v813 = vpop.permute.xlu0 %812
        %814 = vrot.lane.b32.xlu0 %v210, 127
        %v815 = vpop.permute.xlu0 %814
        %816 = vrot.lane.b32.xlu0 %v211, 127
        %v817 = vpop.permute.xlu0 %816
        %818 = vrot.lane.b32.xlu0 %v212, 127
        %v819 = vpop.permute.xlu0 %818
        %v820 = vsel %vm575, %v811, %v813
        %v821 = vsel %vm575, %v813, %v815
        %v822 = vsel %vm575, %v815, %v817
        %v823 = vsel %vm575, %v817, %v819
        %v829 = vmul.f32 %v785, %v820
        %v830 = vmul.f32 %v786, %v821
        %v831 = vmul.f32 %v787, %v822
        %v832 = vmul.f32 %v788, %v823
        %v833 = vmul.f32 %v789, %v819
        %v834 = vmul.f32 %v790, %v820
        %v835 = vmul.f32 %v791, %v821
        %v836 = vmul.f32 %v792, %v822
        %v837 = vmul.f32 %v793, %v823
        %v838 = vmul.f32 %v794, %v819
        %v839 = vmul.f32 %v795, %v820
        %v840 = vmul.f32 %v796, %v821
        %v841 = vmul.f32 %v797, %v822
        %v842 = vmul.f32 %v798, %v823
        %v843 = vmul.f32 %v799, %v819
        %v844 = vmul.f32 %v800, %v820
        %v845 = vmul.f32 %v801, %v821
        %v846 = vmul.f32 %v802, %v822
        %v847 = vmul.f32 %v803, %v823
        %v848 = vmul.f32 %v804, %v819
        %849 = vrot.lane.b32.xlu0 %v163, 120
        %v850 = vpop.permute.xlu0 %849
        %851 = vrot.lane.b32.xlu0 %v164, 120
        %v852 = vpop.permute.xlu0 %851
        %853 = vrot.lane.b32.xlu0 %v165, 120
        %v854 = vpop.permute.xlu0 %853
        %855 = vrot.lane.b32.xlu0 %v166, 120
        %v856 = vpop.permute.xlu0 %855
        %857 = vrot.lane.b32.xlu0 %v167, 120
        %v858 = vpop.permute.xlu0 %857
        %859 = vrot.lane.b32.xlu0 %v168, 120
        %v860 = vpop.permute.xlu0 %859
        %861 = vrot.lane.b32.xlu0 %v169, 120
        %v862 = vpop.permute.xlu0 %861
        %863 = vrot.lane.b32.xlu0 %v170, 120
        %v864 = vpop.permute.xlu0 %863
        %865 = vrot.lane.b32.xlu0 %v171, 120
        %v866 = vpop.permute.xlu0 %865
        %867 = vrot.lane.b32.xlu0 %v172, 120
        %v868 = vpop.permute.xlu0 %867
        %869 = vrot.lane.b32.xlu0 %v173, 120
        %v870 = vpop.permute.xlu0 %869
        %871 = vrot.lane.b32.xlu0 %v174, 120
        %v872 = vpop.permute.xlu0 %871
        %vm873 = vcmask 261120
        %v874 = vsel %vm873, %v850, 0
        %v876 = vsel %vm873, %v852, 0
        %v878 = vsel %vm873, %v854, 0
        %v880 = vsel %vm873, %v856, 0
        %v882 = vsel %vm873, %v858, 0
        %v884 = vsel %vm873, %v860, 0
        %v886 = vsel %vm873, %v862, 0
        %v888 = vsel %vm873, %v864, 0
        %v890 = vsel %vm873, %v866, 0
        %v892 = vsel %vm873, %v868, 0
        %v894 = vsel %vm873, %v870, 0
        %v896 = vsel %vm873, %v872, 0
        %898 = vmatpush.msra.mxu0 0.0
        %899 = vmatpush.msra.mxu0 0.0
        %900 = vmatpush.msra.mxu0 0.0
        %901 = vmatpush.msra.mxu0 0.0
        %902 = vmatpush.msra.mxu0 0.0
        %903 = vmatpush.msra.mxu0 0.0
        %904 = vmatpush.msra.mxu0 0.0
        %905 = vmatpush.msra.mxu0 0.0
        %906 = vmatpush.msra.mxu0 0.0
        %907 = vmatpush.msra.mxu0 0.0
        %908 = vmatpush.msra.mxu0 0.0
        %909 = vmatpush.msra.mxu0 0.0
        %910 = vmatpush.msra.mxu0 %v844
        %911 = vmatpush.msra.mxu0 %v839
        %912 = vmatpush.msra.mxu0 %v834
        %913 = vmatpush.msra.mxu0 %v829
        %914 = vmatmul.f32.gmra.mxu0 %v874
        %v915 = vpop.f32.mrf.mxu0
        %v916 = vadd.f32 0.0, %v915
        %917 = vmatmul.f32.gmra.mxu0 %v876
        %v918 = vpop.f32.mrf.mxu0
        %v919 = vadd.f32 0.0, %v918
        %920 = vmatmul.f32.gmra.mxu0 %v878
        %v921 = vpop.f32.mrf.mxu0
        %v922 = vadd.f32 0.0, %v921
        %923 = vmatmul.f32.gmra.mxu0 %v880
        %v924 = vpop.f32.mrf.mxu0
        %v925 = vadd.f32 0.0, %v924
        %926 = vmatmul.f32.gmra.mxu0 %v882
        %v927 = vpop.f32.mrf.mxu0
        %v928 = vadd.f32 0.0, %v927
        %929 = vmatmul.f32.gmra.mxu0 %v884
        %v930 = vpop.f32.mrf.mxu0
        %v931 = vadd.f32 0.0, %v930
        %932 = vmatmul.f32.gmra.mxu0 %v886
        %v933 = vpop.f32.mrf.mxu0
        %v934 = vadd.f32 0.0, %v933
        %935 = vmatmul.f32.gmra.mxu0 %v888
        %v936 = vpop.f32.mrf.mxu0
        %v937 = vadd.f32 0.0, %v936
        %938 = vmatmul.f32.gmra.mxu0 %v890
        %v939 = vpop.f32.mrf.mxu0
        %v940 = vadd.f32 0.0, %v939
        %941 = vmatmul.f32.gmra.mxu0 %v892
        %v942 = vpop.f32.mrf.mxu0
        %v943 = vadd.f32 0.0, %v942
        %944 = vmatmul.f32.gmra.mxu0 %v894
        %v945 = vpop.f32.mrf.mxu0
        %v946 = vadd.f32 0.0, %v945
        %947 = vmatmul.f32.gmra.mxu0 %v896
        %v948 = vpop.f32.mrf.mxu0
        %v949 = vadd.f32 0.0, %v948
        %950 = vdwg.mxu0
        %951 = vmatpush.msra.mxu0 0.0
        %952 = vmatpush.msra.mxu0 0.0
        %953 = vmatpush.msra.mxu0 0.0
        %954 = vmatpush.msra.mxu0 0.0
        %955 = vmatpush.msra.mxu0 0.0
        %956 = vmatpush.msra.mxu0 0.0
        %957 = vmatpush.msra.mxu0 0.0
        %958 = vmatpush.msra.mxu0 0.0
        %959 = vmatpush.msra.mxu0 0.0
        %960 = vmatpush.msra.mxu0 0.0
        %961 = vmatpush.msra.mxu0 0.0
        %962 = vmatpush.msra.mxu0 0.0
        %963 = vmatpush.msra.mxu0 %v845
        %964 = vmatpush.msra.mxu0 %v840
        %965 = vmatpush.msra.mxu0 %v835
        %966 = vmatpush.msra.mxu0 %v830
        %967 = vmatmul.f32.gmra.mxu0 %v874
        %v968 = vpop.f32.mrf.mxu0
        %v969 = vadd.f32 0.0, %v968
        %970 = vmatmul.f32.gmra.mxu0 %v876
        %v971 = vpop.f32.mrf.mxu0
        %v972 = vadd.f32 0.0, %v971
        %973 = vmatmul.f32.gmra.mxu0 %v878
        %v974 = vpop.f32.mrf.mxu0
        %v975 = vadd.f32 0.0, %v974
        %976 = vmatmul.f32.gmra.mxu0 %v880
        %v977 = vpop.f32.mrf.mxu0
        %v978 = vadd.f32 0.0, %v977
        %979 = vmatmul.f32.gmra.mxu0 %v882
        %v980 = vpop.f32.mrf.mxu0
        %v981 = vadd.f32 0.0, %v980
        %982 = vmatmul.f32.gmra.mxu0 %v884
        %v983 = vpop.f32.mrf.mxu0
        %v984 = vadd.f32 0.0, %v983
        %985 = vmatmul.f32.gmra.mxu0 %v886
        %v986 = vpop.f32.mrf.mxu0
        %v987 = vadd.f32 0.0, %v986
        %988 = vmatmul.f32.gmra.mxu0 %v888
        %v989 = vpop.f32.mrf.mxu0
        %v990 = vadd.f32 0.0, %v989
        %991 = vmatmul.f32.gmra.mxu0 %v890
        %v992 = vpop.f32.mrf.mxu0
        %v993 = vadd.f32 0.0, %v992
        %994 = vmatmul.f32.gmra.mxu0 %v892
        %v995 = vpop.f32.mrf.mxu0
        %v996 = vadd.f32 0.0, %v995
        %997 = vmatmul.f32.gmra.mxu0 %v894
        %v998 = vpop.f32.mrf.mxu0
        %v999 = vadd.f32 0.0, %v998
        %1000 = vmatmul.f32.gmra.mxu0 %v896
        %v1001 = vpop.f32.mrf.mxu0
        %v1002 = vadd.f32 0.0, %v1001
        %1003 = vdwg.mxu0
        %1004 = vmatpush.msra.mxu0 0.0
        %1005 = vmatpush.msra.mxu0 0.0
        %1006 = vmatpush.msra.mxu0 0.0
        %1007 = vmatpush.msra.mxu0 0.0
        %1008 = vmatpush.msra.mxu0 0.0
        %1009 = vmatpush.msra.mxu0 0.0
        %1010 = vmatpush.msra.mxu0 0.0
        %1011 = vmatpush.msra.mxu0 0.0
        %1012 = vmatpush.msra.mxu0 0.0
        %1013 = vmatpush.msra.mxu0 0.0
        %1014 = vmatpush.msra.mxu0 0.0
        %1015 = vmatpush.msra.mxu0 0.0
        %1016 = vmatpush.msra.mxu0 %v846
        %1017 = vmatpush.msra.mxu0 %v841
        %1018 = vmatpush.msra.mxu0 %v836
        %1019 = vmatpush.msra.mxu0 %v831
        %1020 = vmatmul.f32.gmra.mxu0 %v874
        %v1021 = vpop.f32.mrf.mxu0
        %v1022 = vadd.f32 0.0, %v1021
        %1023 = vmatmul.f32.gmra.mxu0 %v876
        %v1024 = vpop.f32.mrf.mxu0
        %v1025 = vadd.f32 0.0, %v1024
        %1026 = vmatmul.f32.gmra.mxu0 %v878
        %v1027 = vpop.f32.mrf.mxu0
        %v1028 = vadd.f32 0.0, %v1027
        %1029 = vmatmul.f32.gmra.mxu0 %v880
        %v1030 = vpop.f32.mrf.mxu0
        %v1031 = vadd.f32 0.0, %v1030
        %1032 = vmatmul.f32.gmra.mxu0 %v882
        %v1033 = vpop.f32.mrf.mxu0
        %v1034 = vadd.f32 0.0, %v1033
        %1035 = vmatmul.f32.gmra.mxu0 %v884
        %v1036 = vpop.f32.mrf.mxu0
        %v1037 = vadd.f32 0.0, %v1036
        %1038 = vmatmul.f32.gmra.mxu0 %v886
        %v1039 = vpop.f32.mrf.mxu0
        %v1040 = vadd.f32 0.0, %v1039
        %1041 = vmatmul.f32.gmra.mxu0 %v888
        %v1042 = vpop.f32.mrf.mxu0
        %v1043 = vadd.f32 0.0, %v1042
        %1044 = vmatmul.f32.gmra.mxu0 %v890
        %v1045 = vpop.f32.mrf.mxu0
        %v1046 = vadd.f32 0.0, %v1045
        %1047 = vmatmul.f32.gmra.mxu0 %v892
        %v1048 = vpop.f32.mrf.mxu0
        %v1049 = vadd.f32 0.0, %v1048
        %1050 = vmatmul.f32.gmra.mxu0 %v894
        %v1051 = vpop.f32.mrf.mxu0
        %v1052 = vadd.f32 0.0, %v1051
        %1053 = vmatmul.f32.gmra.mxu0 %v896
        %v1054 = vpop.f32.mrf.mxu0
        %v1055 = vadd.f32 0.0, %v1054
        %1056 = vdwg.mxu0
        %1057 = vmatpush.msra.mxu0 0.0
        %1058 = vmatpush.msra.mxu0 0.0
        %1059 = vmatpush.msra.mxu0 0.0
        %1060 = vmatpush.msra.mxu0 0.0
        %1061 = vmatpush.msra.mxu0 0.0
        %1062 = vmatpush.msra.mxu0 0.0
        %1063 = vmatpush.msra.mxu0 0.0
        %1064 = vmatpush.msra.mxu0 0.0
        %1065 = vmatpush.msra.mxu0 0.0
        %1066 = vmatpush.msra.mxu0 0.0
        %1067 = vmatpush.msra.mxu0 0.0
        %1068 = vmatpush.msra.mxu0 0.0
        %1069 = vmatpush.msra.mxu0 %v847
        %1070 = vmatpush.msra.mxu0 %v842
        %1071 = vmatpush.msra.mxu0 %v837
        %1072 = vmatpush.msra.mxu0 %v832
        %1073 = vmatmul.f32.gmra.mxu0 %v874
        %v1074 = vpop.f32.mrf.mxu0
        %v1075 = vadd.f32 0.0, %v1074
        %1076 = vmatmul.f32.gmra.mxu0 %v876
        %v1077 = vpop.f32.mrf.mxu0
        %v1078 = vadd.f32 0.0, %v1077
        %1079 = vmatmul.f32.gmra.mxu0 %v878
        %v1080 = vpop.f32.mrf.mxu0
        %v1081 = vadd.f32 0.0, %v1080
        %1082 = vmatmul.f32.gmra.mxu0 %v880
        %v1083 = vpop.f32.mrf.mxu0
        %v1084 = vadd.f32 0.0, %v1083
        %1085 = vmatmul.f32.gmra.mxu0 %v882
        %v1086 = vpop.f32.mrf.mxu0
        %v1087 = vadd.f32 0.0, %v1086
        %1088 = vmatmul.f32.gmra.mxu0 %v884
        %v1089 = vpop.f32.mrf.mxu0
        %v1090 = vadd.f32 0.0, %v1089
        %1091 = vmatmul.f32.gmra.mxu0 %v886
        %v1092 = vpop.f32.mrf.mxu0
        %v1093 = vadd.f32 0.0, %v1092
        %1094 = vmatmul.f32.gmra.mxu0 %v888
        %v1095 = vpop.f32.mrf.mxu0
        %v1096 = vadd.f32 0.0, %v1095
        %1097 = vmatmul.f32.gmra.mxu0 %v890
        %v1098 = vpop.f32.mrf.mxu0
        %v1099 = vadd.f32 0.0, %v1098
        %1100 = vmatmul.f32.gmra.mxu0 %v892
        %v1101 = vpop.f32.mrf.mxu0
        %v1102 = vadd.f32 0.0, %v1101
        %1103 = vmatmul.f32.gmra.mxu0 %v894
        %v1104 = vpop.f32.mrf.mxu0
        %v1105 = vadd.f32 0.0, %v1104
        %1106 = vmatmul.f32.gmra.mxu0 %v896
        %v1107 = vpop.f32.mrf.mxu0
        %v1108 = vadd.f32 0.0, %v1107
        %1109 = vdwg.mxu0
        %1110 = vmatpush.msra.mxu0 0.0
        %1111 = vmatpush.msra.mxu0 0.0
        %1112 = vmatpush.msra.mxu0 0.0
        %1113 = vmatpush.msra.mxu0 0.0
        %1114 = vmatpush.msra.mxu0 0.0
        %1115 = vmatpush.msra.mxu0 0.0
        %1116 = vmatpush.msra.mxu0 0.0
        %1117 = vmatpush.msra.mxu0 0.0
        %1118 = vmatpush.msra.mxu0 0.0
        %1119 = vmatpush.msra.mxu0 0.0
        %1120 = vmatpush.msra.mxu0 0.0
        %1121 = vmatpush.msra.mxu0 0.0
        %1122 = vmatpush.msra.mxu0 %v848
        %1123 = vmatpush.msra.mxu0 %v843
        %1124 = vmatpush.msra.mxu0 %v838
        %1125 = vmatpush.msra.mxu0 %v833
        %1126 = vmatmul.f32.gmra.mxu0 %v874
        %v1127 = vpop.f32.mrf.mxu0
        %v1128 = vadd.f32 0.0, %v1127
        %1129 = vmatmul.f32.gmra.mxu0 %v876
        %v1130 = vpop.f32.mrf.mxu0
        %v1131 = vadd.f32 0.0, %v1130
        %1132 = vmatmul.f32.gmra.mxu0 %v878
        %v1133 = vpop.f32.mrf.mxu0
        %v1134 = vadd.f32 0.0, %v1133
        %1135 = vmatmul.f32.gmra.mxu0 %v880
        %v1136 = vpop.f32.mrf.mxu0
        %v1137 = vadd.f32 0.0, %v1136
        %1138 = vmatmul.f32.gmra.mxu0 %v882
        %v1139 = vpop.f32.mrf.mxu0
        %v1140 = vadd.f32 0.0, %v1139
        %1141 = vmatmul.f32.gmra.mxu0 %v884
        %v1142 = vpop.f32.mrf.mxu0
        %v1143 = vadd.f32 0.0, %v1142
        %1144 = vmatmul.f32.gmra.mxu0 %v886
        %v1145 = vpop.f32.mrf.mxu0
        %v1146 = vadd.f32 0.0, %v1145
        %1147 = vmatmul.f32.gmra.mxu0 %v888
        %v1148 = vpop.f32.mrf.mxu0
        %v1149 = vadd.f32 0.0, %v1148
        %1150 = vmatmul.f32.gmra.mxu0 %v890
        %v1151 = vpop.f32.mrf.mxu0
        %v1152 = vadd.f32 0.0, %v1151
        %1153 = vmatmul.f32.gmra.mxu0 %v892
        %v1154 = vpop.f32.mrf.mxu0
        %v1155 = vadd.f32 0.0, %v1154
        %1156 = vmatmul.f32.gmra.mxu0 %v894
        %v1157 = vpop.f32.mrf.mxu0
        %v1158 = vadd.f32 0.0, %v1157
        %1159 = vmatmul.f32.gmra.mxu0 %v896
        %v1160 = vpop.f32.mrf.mxu0
        %v1161 = vadd.f32 0.0, %v1160
        %1162 = vdwg.mxu0
        %1183 = vrot.lane.b32.xlu0 %v928, 127
        %v1184 = vpop.permute.xlu0 %1183
        %1185 = vrot.lane.b32.xlu0 %v981, 127
        %v1186 = vpop.permute.xlu0 %1185
        %1187 = vrot.lane.b32.xlu0 %v1034, 127
        %v1188 = vpop.permute.xlu0 %1187
        %1189 = vrot.lane.b32.xlu0 %v1087, 127
        %v1190 = vpop.permute.xlu0 %1189
        %1191 = vrot.lane.b32.xlu0 %v1140, 127
        %v1192 = vpop.permute.xlu0 %1191
        %1193 = vrot.lane.b32.xlu0 %v931, 127
        %v1194 = vpop.permute.xlu0 %1193
        %1195 = vrot.lane.b32.xlu0 %v984, 127
        %v1196 = vpop.permute.xlu0 %1195
        %1197 = vrot.lane.b32.xlu0 %v1037, 127
        %v1198 = vpop.permute.xlu0 %1197
        %1199 = vrot.lane.b32.xlu0 %v1090, 127
        %v1200 = vpop.permute.xlu0 %1199
        %1201 = vrot.lane.b32.xlu0 %v1143, 127
        %v1202 = vpop.permute.xlu0 %1201
        %1203 = vrot.lane.b32.xlu0 %v934, 127
        %v1204 = vpop.permute.xlu0 %1203
        %1205 = vrot.lane.b32.xlu0 %v987, 127
        %v1206 = vpop.permute.xlu0 %1205
        %1207 = vrot.lane.b32.xlu0 %v1040, 127
        %v1208 = vpop.permute.xlu0 %1207
        %1209 = vrot.lane.b32.xlu0 %v1093, 127
        %v1210 = vpop.permute.xlu0 %1209
        %1211 = vrot.lane.b32.xlu0 %v1146, 127
        %v1212 = vpop.permute.xlu0 %1211
        %1213 = vrot.lane.b32.xlu0 %v937, 127
        %v1214 = vpop.permute.xlu0 %1213
        %1215 = vrot.lane.b32.xlu0 %v990, 127
        %v1216 = vpop.permute.xlu0 %1215
        %1217 = vrot.lane.b32.xlu0 %v1043, 127
        %v1218 = vpop.permute.xlu0 %1217
        %1219 = vrot.lane.b32.xlu0 %v1096, 127
        %v1220 = vpop.permute.xlu0 %1219
        %1221 = vrot.lane.b32.xlu0 %v1149, 127
        %v1222 = vpop.permute.xlu0 %1221
        %v1223 = vsel %vm575, %v1184, %v1186
        %v1224 = vsel %vm575, %v1186, %v1188
        %v1225 = vsel %vm575, %v1188, %v1190
        %v1226 = vsel %vm575, %v1190, %v1192
        %v1227 = vsel %vm575, %v1194, %v1196
        %v1228 = vsel %vm575, %v1196, %v1198
        %v1229 = vsel %vm575, %v1198, %v1200
        %v1230 = vsel %vm575, %v1200, %v1202
        %v1231 = vsel %vm575, %v1204, %v1206
        %v1232 = vsel %vm575, %v1206, %v1208
        %v1233 = vsel %vm575, %v1208, %v1210
        %v1234 = vsel %vm575, %v1210, %v1212
        %v1235 = vsel %vm575, %v1214, %v1216
        %v1236 = vsel %vm575, %v1216, %v1218
        %v1237 = vsel %vm575, %v1218, %v1220
        %v1238 = vsel %vm575, %v1220, %v1222
        %v1259 = vadd.f32 %v916, %v1223
        %v1260 = vadd.f32 %v969, %v1224
        %v1261 = vadd.f32 %v1022, %v1225
        %v1262 = vadd.f32 %v1075, %v1226
        %v1263 = vadd.f32 %v1128, %v1192
        %v1264 = vadd.f32 %v919, %v1227
        %v1265 = vadd.f32 %v972, %v1228
        %v1266 = vadd.f32 %v1025, %v1229
        %v1267 = vadd.f32 %v1078, %v1230
        %v1268 = vadd.f32 %v1131, %v1202
        %v1269 = vadd.f32 %v922, %v1231
        %v1270 = vadd.f32 %v975, %v1232
        %v1271 = vadd.f32 %v1028, %v1233
        %v1272 = vadd.f32 %v1081, %v1234
        %v1273 = vadd.f32 %v1134, %v1212
        %v1274 = vadd.f32 %v925, %v1235
        %v1275 = vadd.f32 %v978, %v1236
        %v1276 = vadd.f32 %v1031, %v1237
        %v1277 = vadd.f32 %v1084, %v1238
        %v1278 = vadd.f32 %v1137, %v1222
        %1299 = vrot.lane.b32.xlu0 %v940, 126
        %v1300 = vpop.permute.xlu0 %1299
        %1301 = vrot.lane.b32.xlu0 %v993, 126
        %v1302 = vpop.permute.xlu0 %1301
        %1303 = vrot.lane.b32.xlu0 %v1046, 126
        %v1304 = vpop.permute.xlu0 %1303
        %1305 = vrot.lane.b32.xlu0 %v1099, 126
        %v1306 = vpop.permute.xlu0 %1305
        %1307 = vrot.lane.b32.xlu0 %v1152, 126
        %v1308 = vpop.permute.xlu0 %1307
        %1309 = vrot.lane.b32.xlu0 %v943, 126
        %v1310 = vpop.permute.xlu0 %1309
        %1311 = vrot.lane.b32.xlu0 %v996, 126
        %v1312 = vpop.permute.xlu0 %1311
        %1313 = vrot.lane.b32.xlu0 %v1049, 126
        %v1314 = vpop.permute.xlu0 %1313
        %1315 = vrot.lane.b32.xlu0 %v1102, 126
        %v1316 = vpop.permute.xlu0 %1315
        %1317 = vrot.lane.b32.xlu0 %v1155, 126
        %v1318 = vpop.permute.xlu0 %1317
        %1319 = vrot.lane.b32.xlu0 %v946, 126
        %v1320 = vpop.permute.xlu0 %1319
        %1321 = vrot.lane.b32.xlu0 %v999, 126
        %v1322 = vpop.permute.xlu0 %1321
        %1323 = vrot.lane.b32.xlu0 %v1052, 126
        %v1324 = vpop.permute.xlu0 %1323
        %1325 = vrot.lane.b32.xlu0 %v1105, 126
        %v1326 = vpop.permute.xlu0 %1325
        %1327 = vrot.lane.b32.xlu0 %v1158, 126
        %v1328 = vpop.permute.xlu0 %1327
        %1329 = vrot.lane.b32.xlu0 %v949, 126
        %v1330 = vpop.permute.xlu0 %1329
        %1331 = vrot.lane.b32.xlu0 %v1002, 126
        %v1332 = vpop.permute.xlu0 %1331
        %1333 = vrot.lane.b32.xlu0 %v1055, 126
        %v1334 = vpop.permute.xlu0 %1333
        %1335 = vrot.lane.b32.xlu0 %v1108, 126
        %v1336 = vpop.permute.xlu0 %1335
        %1337 = vrot.lane.b32.xlu0 %v1161, 126
        %v1338 = vpop.permute.xlu0 %1337
        %v1339 = vsel %vm692, %v1300, %v1302
        %v1340 = vsel %vm692, %v1302, %v1304
        %v1341 = vsel %vm692, %v1304, %v1306
        %v1342 = vsel %vm692, %v1306, %v1308
        %v1343 = vsel %vm692, %v1310, %v1312
        %v1344 = vsel %vm692, %v1312, %v1314
        %v1345 = vsel %vm692, %v1314, %v1316
        %v1346 = vsel %vm692, %v1316, %v1318
        %v1347 = vsel %vm692, %v1320, %v1322
        %v1348 = vsel %vm692, %v1322, %v1324
        %v1349 = vsel %vm692, %v1324, %v1326
        %v1350 = vsel %vm692, %v1326, %v1328
        %v1351 = vsel %vm692, %v1330, %v1332
        %v1352 = vsel %vm692, %v1332, %v1334
        %v1353 = vsel %vm692, %v1334, %v1336
        %v1354 = vsel %vm692, %v1336, %v1338
        %v1375 = vadd.f32 %v1259, %v1339
        %v1376 = vadd.f32 %v1260, %v1340
        %v1377 = vadd.f32 %v1261, %v1341
        %v1378 = vadd.f32 %v1262, %v1342
        %v1379 = vadd.f32 %v1263, %v1308
        %v1380 = vadd.f32 %v1264, %v1343
        %v1381 = vadd.f32 %v1265, %v1344
        %v1382 = vadd.f32 %v1266, %v1345
        %v1383 = vadd.f32 %v1267, %v1346
        %v1384 = vadd.f32 %v1268, %v1318
        %v1385 = vadd.f32 %v1269, %v1347
        %v1386 = vadd.f32 %v1270, %v1348
        %v1387 = vadd.f32 %v1271, %v1349
        %v1388 = vadd.f32 %v1272, %v1350
        %v1389 = vadd.f32 %v1273, %v1328
        %v1390 = vadd.f32 %v1274, %v1351
        %v1391 = vadd.f32 %v1275, %v1352
        %v1392 = vadd.f32 %v1276, %v1353
        %v1393 = vadd.f32 %v1277, %v1354
        %v1394 = vadd.f32 %v1278, %v1338
        %1395 = vset.pattern.permute.xlu0 72
        %1396 = vperm.xlu0 %1395, %v167
        %v1397 = vpop.permute.xlu0 %1396
        %1399 = vset.pattern.permute.xlu0 72
        %1400 = vperm.xlu0 %1399, %v168
        %v1401 = vpop.permute.xlu0 %1400
        %1403 = vset.pattern.permute.xlu0 72
        %1404 = vperm.xlu0 %1403, %v169
        %v1405 = vpop.permute.xlu0 %1404
        %1407 = vset.pattern.permute.xlu0 72
        %1408 = vperm.xlu0 %1407, %v170
        %v1409 = vpop.permute.xlu0 %1408
        %v1411 = vadd.f32 %v1375, %v1397
        %v1412 = vadd.f32 %v1376, %v1397
        %v1413 = vadd.f32 %v1377, %v1397
        %v1414 = vadd.f32 %v1378, %v1397
        %v1415 = vadd.f32 %v1379, %v1397
        %v1416 = vadd.f32 %v1380, %v1401
        %v1417 = vadd.f32 %v1381, %v1401
        %v1418 = vadd.f32 %v1382, %v1401
        %v1419 = vadd.f32 %v1383, %v1401
        %v1420 = vadd.f32 %v1384, %v1401
        %v1421 = vadd.f32 %v1385, %v1405
        %v1422 = vadd.f32 %v1386, %v1405
        %v1423 = vadd.f32 %v1387, %v1405
        %v1424 = vadd.f32 %v1388, %v1405
        %v1425 = vadd.f32 %v1389, %v1405
        %v1426 = vadd.f32 %v1390, %v1409
        %v1427 = vadd.f32 %v1391, %v1409
        %v1428 = vadd.f32 %v1392, %v1409
        %v1429 = vadd.f32 %v1393, %v1409
        %v1430 = vadd.f32 %v1394, %v1409
        %v1431 = vmax.f32 %v1411, 0.0
        %v1432 = vmax.f32 %v1412, 0.0
        %v1433 = vmax.f32 %v1413, 0.0
        %v1434 = vmax.f32 %v1414, 0.0
        %v1435 = vmax.f32 %v1415, 0.0
        %v1436 = vmax.f32 %v1416, 0.0
        %v1437 = vmax.f32 %v1417, 0.0
        %v1438 = vmax.f32 %v1418, 0.0
        %v1439 = vmax.f32 %v1419, 0.0
        %v1440 = vmax.f32 %v1420, 0.0
        %v1441 = vmax.f32 %v1421, 0.0
        %v1442 = vmax.f32 %v1422, 0.0
        %v1443 = vmax.f32 %v1423, 0.0
        %v1444 = vmax.f32 %v1424, 0.0
        %v1445 = vmax.f32 %v1425, 0.0
        %v1446 = vmax.f32 %v1426, 0.0
        %v1447 = vmax.f32 %v1427, 0.0
        %v1448 = vmax.f32 %v1428, 0.0
        %v1449 = vmax.f32 %v1429, 0.0
        %v1450 = vmax.f32 %v1430, 0.0
        %1451 = vrot.lane.b32.xlu0 %v208, 126
        %v1452 = vpop.permute.xlu0 %1451
        %1453 = vrot.lane.b32.xlu0 %v209, 126
        %v1454 = vpop.permute.xlu0 %1453
        %1455 = vrot.lane.b32.xlu0 %v210, 126
        %v1456 = vpop.permute.xlu0 %1455
        %1457 = vrot.lane.b32.xlu0 %v211, 126
        %v1458 = vpop.permute.xlu0 %1457
        %1459 = vrot.lane.b32.xlu0 %v212, 126
        %v1460 = vpop.permute.xlu0 %1459
        %v1461 = vsel %vm692, %v1452, %v1454
        %v1462 = vsel %vm692, %v1454, %v1456
        %v1463 = vsel %vm692, %v1456, %v1458
        %v1464 = vsel %vm692, %v1458, %v1460
        %v1470 = vmul.f32 %v1431, %v1461
        %v1471 = vmul.f32 %v1432, %v1462
        %v1472 = vmul.f32 %v1433, %v1463
        %v1473 = vmul.f32 %v1434, %v1464
        %v1474 = vmul.f32 %v1435, %v1460
        %v1475 = vmul.f32 %v1436, %v1461
        %v1476 = vmul.f32 %v1437, %v1462
        %v1477 = vmul.f32 %v1438, %v1463
        %v1478 = vmul.f32 %v1439, %v1464
        %v1479 = vmul.f32 %v1440, %v1460
        %v1480 = vmul.f32 %v1441, %v1461
        %v1481 = vmul.f32 %v1442, %v1462
        %v1482 = vmul.f32 %v1443, %v1463
        %v1483 = vmul.f32 %v1444, %v1464
        %v1484 = vmul.f32 %v1445, %v1460
        %v1485 = vmul.f32 %v1446, %v1461
        %v1486 = vmul.f32 %v1447, %v1462
        %v1487 = vmul.f32 %v1448, %v1463
        %v1488 = vmul.f32 %v1449, %v1464
        %v1489 = vmul.f32 %v1450, %v1460
        %1490 = vrot.lane.b32.xlu0 %v163, 88
        %v1491 = vpop.permute.xlu0 %1490
        %1492 = vrot.lane.b32.xlu0 %v164, 88
        %v1493 = vpop.permute.xlu0 %1492
        %1494 = vrot.lane.b32.xlu0 %v165, 88
        %v1495 = vpop.permute.xlu0 %1494
        %1496 = vrot.lane.b32.xlu0 %v166, 88
        %v1497 = vpop.permute.xlu0 %1496
        %1498 = vrot.lane.b32.xlu0 %v167, 88
        %v1499 = vpop.permute.xlu0 %1498
        %1500 = vrot.lane.b32.xlu0 %v168, 88
        %v1501 = vpop.permute.xlu0 %1500
        %1502 = vrot.lane.b32.xlu0 %v169, 88
        %v1503 = vpop.permute.xlu0 %1502
        %1504 = vrot.lane.b32.xlu0 %v170, 88
        %v1505 = vpop.permute.xlu0 %1504
        %1506 = vrot.lane.b32.xlu0 %v171, 88
        %v1507 = vpop.permute.xlu0 %1506
        %1508 = vrot.lane.b32.xlu0 %v172, 88
        %v1509 = vpop.permute.xlu0 %1508
        %1510 = vrot.lane.b32.xlu0 %v173, 88
        %v1511 = vpop.permute.xlu0 %1510
        %1512 = vrot.lane.b32.xlu0 %v174, 88
        %v1513 = vpop.permute.xlu0 %1512
        %v1514 = vsel %vm873, %v1491, 0
        %v1516 = vsel %vm873, %v1493, 0
        %v1518 = vsel %vm873, %v1495, 0
        %v1520 = vsel %vm873, %v1497, 0
        %v1522 = vsel %vm873, %v1499, 0
        %v1524 = vsel %vm873, %v1501, 0
        %v1526 = vsel %vm873, %v1503, 0
        %v1528 = vsel %vm873, %v1505, 0
        %v1530 = vsel %vm873, %v1507, 0
        %v1532 = vsel %vm873, %v1509, 0
        %v1534 = vsel %vm873, %v1511, 0
        %v1536 = vsel %vm873, %v1513, 0
        %1538 = vmatpush.msra.mxu0 0.0
        %1539 = vmatpush.msra.mxu0 0.0
        %1540 = vmatpush.msra.mxu0 0.0
        %1541 = vmatpush.msra.mxu0 0.0
        %1542 = vmatpush.msra.mxu0 0.0
        %1543 = vmatpush.msra.mxu0 0.0
        %1544 = vmatpush.msra.mxu0 0.0
        %1545 = vmatpush.msra.mxu0 0.0
        %1546 = vmatpush.msra.mxu0 0.0
        %1547 = vmatpush.msra.mxu0 0.0
        %1548 = vmatpush.msra.mxu0 0.0
        %1549 = vmatpush.msra.mxu0 0.0
        %1550 = vmatpush.msra.mxu0 %v1485
        %1551 = vmatpush.msra.mxu0 %v1480
        %1552 = vmatpush.msra.mxu0 %v1475
        %1553 = vmatpush.msra.mxu0 %v1470
        %1554 = vmatmul.f32.gmra.mxu0 %v1514
        %v1555 = vpop.f32.mrf.mxu0
        %v1556 = vadd.f32 0.0, %v1555
        %1557 = vmatmul.f32.gmra.mxu0 %v1516
        %v1558 = vpop.f32.mrf.mxu0
        %v1559 = vadd.f32 0.0, %v1558
        %1560 = vmatmul.f32.gmra.mxu0 %v1518
        %v1561 = vpop.f32.mrf.mxu0
        %v1562 = vadd.f32 0.0, %v1561
        %1563 = vmatmul.f32.gmra.mxu0 %v1520
        %v1564 = vpop.f32.mrf.mxu0
        %v1565 = vadd.f32 0.0, %v1564
        %1566 = vmatmul.f32.gmra.mxu0 %v1522
        %v1567 = vpop.f32.mrf.mxu0
        %v1568 = vadd.f32 0.0, %v1567
        %1569 = vmatmul.f32.gmra.mxu0 %v1524
        %v1570 = vpop.f32.mrf.mxu0
        %v1571 = vadd.f32 0.0, %v1570
        %1572 = vmatmul.f32.gmra.mxu0 %v1526
        %v1573 = vpop.f32.mrf.mxu0
        %v1574 = vadd.f32 0.0, %v1573
        %1575 = vmatmul.f32.gmra.mxu0 %v1528
        %v1576 = vpop.f32.mrf.mxu0
        %v1577 = vadd.f32 0.0, %v1576
        %1578 = vmatmul.f32.gmra.mxu0 %v1530
        %v1579 = vpop.f32.mrf.mxu0
        %v1580 = vadd.f32 0.0, %v1579
        %1581 = vmatmul.f32.gmra.mxu0 %v1532
        %v1582 = vpop.f32.mrf.mxu0
        %v1583 = vadd.f32 0.0, %v1582
        %1584 = vmatmul.f32.gmra.mxu0 %v1534
        %v1585 = vpop.f32.mrf.mxu0
        %v1586 = vadd.f32 0.0, %v1585
        %1587 = vmatmul.f32.gmra.mxu0 %v1536
        %v1588 = vpop.f32.mrf.mxu0
        %v1589 = vadd.f32 0.0, %v1588
        %1590 = vdwg.mxu0
        %1591 = vmatpush.msra.mxu0 0.0
        %1592 = vmatpush.msra.mxu0 0.0
        %1593 = vmatpush.msra.mxu0 0.0
        %1594 = vmatpush.msra.mxu0 0.0
        %1595 = vmatpush.msra.mxu0 0.0
        %1596 = vmatpush.msra.mxu0 0.0
        %1597 = vmatpush.msra.mxu0 0.0
        %1598 = vmatpush.msra.mxu0 0.0
        %1599 = vmatpush.msra.mxu0 0.0
        %1600 = vmatpush.msra.mxu0 0.0
        %1601 = vmatpush.msra.mxu0 0.0
        %1602 = vmatpush.msra.mxu0 0.0
        %1603 = vmatpush.msra.mxu0 %v1486
        %1604 = vmatpush.msra.mxu0 %v1481
        %1605 = vmatpush.msra.mxu0 %v1476
        %1606 = vmatpush.msra.mxu0 %v1471
        %1607 = vmatmul.f32.gmra.mxu0 %v1514
        %v1608 = vpop.f32.mrf.mxu0
        %v1609 = vadd.f32 0.0, %v1608
        %1610 = vmatmul.f32.gmra.mxu0 %v1516
        %v1611 = vpop.f32.mrf.mxu0
        %v1612 = vadd.f32 0.0, %v1611
        %1613 = vmatmul.f32.gmra.mxu0 %v1518
        %v1614 = vpop.f32.mrf.mxu0
        %v1615 = vadd.f32 0.0, %v1614
        %1616 = vmatmul.f32.gmra.mxu0 %v1520
        %v1617 = vpop.f32.mrf.mxu0
        %v1618 = vadd.f32 0.0, %v1617
        %1619 = vmatmul.f32.gmra.mxu0 %v1522
        %v1620 = vpop.f32.mrf.mxu0
        %v1621 = vadd.f32 0.0, %v1620
        %1622 = vmatmul.f32.gmra.mxu0 %v1524
        %v1623 = vpop.f32.mrf.mxu0
        %v1624 = vadd.f32 0.0, %v1623
        %1625 = vmatmul.f32.gmra.mxu0 %v1526
        %v1626 = vpop.f32.mrf.mxu0
        %v1627 = vadd.f32 0.0, %v1626
        %1628 = vmatmul.f32.gmra.mxu0 %v1528
        %v1629 = vpop.f32.mrf.mxu0
        %v1630 = vadd.f32 0.0, %v1629
        %1631 = vmatmul.f32.gmra.mxu0 %v1530
        %v1632 = vpop.f32.mrf.mxu0
        %v1633 = vadd.f32 0.0, %v1632
        %1634 = vmatmul.f32.gmra.mxu0 %v1532
        %v1635 = vpop.f32.mrf.mxu0
        %v1636 = vadd.f32 0.0, %v1635
        %1637 = vmatmul.f32.gmra.mxu0 %v1534
        %v1638 = vpop.f32.mrf.mxu0
        %v1639 = vadd.f32 0.0, %v1638
        %1640 = vmatmul.f32.gmra.mxu0 %v1536
        %v1641 = vpop.f32.mrf.mxu0
        %v1642 = vadd.f32 0.0, %v1641
        %1643 = vdwg.mxu0
        %1644 = vmatpush.msra.mxu0 0.0
        %1645 = vmatpush.msra.mxu0 0.0
        %1646 = vmatpush.msra.mxu0 0.0
        %1647 = vmatpush.msra.mxu0 0.0
        %1648 = vmatpush.msra.mxu0 0.0
        %1649 = vmatpush.msra.mxu0 0.0
        %1650 = vmatpush.msra.mxu0 0.0
        %1651 = vmatpush.msra.mxu0 0.0
        %1652 = vmatpush.msra.mxu0 0.0
        %1653 = vmatpush.msra.mxu0 0.0
        %1654 = vmatpush.msra.mxu0 0.0
        %1655 = vmatpush.msra.mxu0 0.0
        %1656 = vmatpush.msra.mxu0 %v1487
        %1657 = vmatpush.msra.mxu0 %v1482
        %1658 = vmatpush.msra.mxu0 %v1477
        %1659 = vmatpush.msra.mxu0 %v1472
        %1660 = vmatmul.f32.gmra.mxu0 %v1514
        %v1661 = vpop.f32.mrf.mxu0
        %v1662 = vadd.f32 0.0, %v1661
        %1663 = vmatmul.f32.gmra.mxu0 %v1516
        %v1664 = vpop.f32.mrf.mxu0
        %v1665 = vadd.f32 0.0, %v1664
        %1666 = vmatmul.f32.gmra.mxu0 %v1518
        %v1667 = vpop.f32.mrf.mxu0
        %v1668 = vadd.f32 0.0, %v1667
        %1669 = vmatmul.f32.gmra.mxu0 %v1520
        %v1670 = vpop.f32.mrf.mxu0
        %v1671 = vadd.f32 0.0, %v1670
        %1672 = vmatmul.f32.gmra.mxu0 %v1522
        %v1673 = vpop.f32.mrf.mxu0
        %v1674 = vadd.f32 0.0, %v1673
        %1675 = vmatmul.f32.gmra.mxu0 %v1524
        %v1676 = vpop.f32.mrf.mxu0
        %v1677 = vadd.f32 0.0, %v1676
        %1678 = vmatmul.f32.gmra.mxu0 %v1526
        %v1679 = vpop.f32.mrf.mxu0
        %v1680 = vadd.f32 0.0, %v1679
        %1681 = vmatmul.f32.gmra.mxu0 %v1528
        %v1682 = vpop.f32.mrf.mxu0
        %v1683 = vadd.f32 0.0, %v1682
        %1684 = vmatmul.f32.gmra.mxu0 %v1530
        %v1685 = vpop.f32.mrf.mxu0
        %v1686 = vadd.f32 0.0, %v1685
        %1687 = vmatmul.f32.gmra.mxu0 %v1532
        %v1688 = vpop.f32.mrf.mxu0
        %v1689 = vadd.f32 0.0, %v1688
        %1690 = vmatmul.f32.gmra.mxu0 %v1534
        %v1691 = vpop.f32.mrf.mxu0
        %v1692 = vadd.f32 0.0, %v1691
        %1693 = vmatmul.f32.gmra.mxu0 %v1536
        %v1694 = vpop.f32.mrf.mxu0
        %v1695 = vadd.f32 0.0, %v1694
        %1696 = vdwg.mxu0
        %1697 = vmatpush.msra.mxu0 0.0
        %1698 = vmatpush.msra.mxu0 0.0
        %1699 = vmatpush.msra.mxu0 0.0
        %1700 = vmatpush.msra.mxu0 0.0
        %1701 = vmatpush.msra.mxu0 0.0
        %1702 = vmatpush.msra.mxu0 0.0
        %1703 = vmatpush.msra.mxu0 0.0
        %1704 = vmatpush.msra.mxu0 0.0
        %1705 = vmatpush.msra.mxu0 0.0
        %1706 = vmatpush.msra.mxu0 0.0
        %1707 = vmatpush.msra.mxu0 0.0
        %1708 = vmatpush.msra.mxu0 0.0
        %1709 = vmatpush.msra.mxu0 %v1488
        %1710 = vmatpush.msra.mxu0 %v1483
        %1711 = vmatpush.msra.mxu0 %v1478
        %1712 = vmatpush.msra.mxu0 %v1473
        %1713 = vmatmul.f32.gmra.mxu0 %v1514
        %v1714 = vpop.f32.mrf.mxu0
        %v1715 = vadd.f32 0.0, %v1714
        %1716 = vmatmul.f32.gmra.mxu0 %v1516
        %v1717 = vpop.f32.mrf.mxu0
        %v1718 = vadd.f32 0.0, %v1717
        %1719 = vmatmul.f32.gmra.mxu0 %v1518
        %v1720 = vpop.f32.mrf.mxu0
        %v1721 = vadd.f32 0.0, %v1720
        %1722 = vmatmul.f32.gmra.mxu0 %v1520
        %v1723 = vpop.f32.mrf.mxu0
        %v1724 = vadd.f32 0.0, %v1723
        %1725 = vmatmul.f32.gmra.mxu0 %v1522
        %v1726 = vpop.f32.mrf.mxu0
        %v1727 = vadd.f32 0.0, %v1726
        %1728 = vmatmul.f32.gmra.mxu0 %v1524
        %v1729 = vpop.f32.mrf.mxu0
        %v1730 = vadd.f32 0.0, %v1729
        %1731 = vmatmul.f32.gmra.mxu0 %v1526
        %v1732 = vpop.f32.mrf.mxu0
        %v1733 = vadd.f32 0.0, %v1732
        %1734 = vmatmul.f32.gmra.mxu0 %v1528
        %v1735 = vpop.f32.mrf.mxu0
        %v1736 = vadd.f32 0.0, %v1735
        %1737 = vmatmul.f32.gmra.mxu0 %v1530
        %v1738 = vpop.f32.mrf.mxu0
        %v1739 = vadd.f32 0.0, %v1738
        %1740 = vmatmul.f32.gmra.mxu0 %v1532
        %v1741 = vpop.f32.mrf.mxu0
        %v1742 = vadd.f32 0.0, %v1741
        %1743 = vmatmul.f32.gmra.mxu0 %v1534
        %v1744 = vpop.f32.mrf.mxu0
        %v1745 = vadd.f32 0.0, %v1744
        %1746 = vmatmul.f32.gmra.mxu0 %v1536
        %v1747 = vpop.f32.mrf.mxu0
        %v1748 = vadd.f32 0.0, %v1747
        %1749 = vdwg.mxu0
        %1750 = vmatpush.msra.mxu0 0.0
        %1751 = vmatpush.msra.mxu0 0.0
        %1752 = vmatpush.msra.mxu0 0.0
        %1753 = vmatpush.msra.mxu0 0.0
        %1754 = vmatpush.msra.mxu0 0.0
        %1755 = vmatpush.msra.mxu0 0.0
        %1756 = vmatpush.msra.mxu0 0.0
        %1757 = vmatpush.msra.mxu0 0.0
        %1758 = vmatpush.msra.mxu0 0.0
        %1759 = vmatpush.msra.mxu0 0.0
        %1760 = vmatpush.msra.mxu0 0.0
        %1761 = vmatpush.msra.mxu0 0.0
        %1762 = vmatpush.msra.mxu0 %v1489
        %1763 = vmatpush.msra.mxu0 %v1484
        %1764 = vmatpush.msra.mxu0 %v1479
        %1765 = vmatpush.msra.mxu0 %v1474
        %1766 = vmatmul.f32.gmra.mxu0 %v1514
        %v1767 = vpop.f32.mrf.mxu0
        %1768 = vmatmul.f32.gmra.mxu0 %v1516
        %v1769 = vpop.f32.mrf.mxu0
        %1770 = vmatmul.f32.gmra.mxu0 %v1518
        %v1771 = vpop.f32.mrf.mxu0
        %1772 = vmatmul.f32.gmra.mxu0 %v1520
        %v1773 = vpop.f32.mrf.mxu0
        %1774 = vmatmul.f32.gmra.mxu0 %v1522
        %v1775 = vpop.f32.mrf.mxu0
        %v1776 = vadd.f32 0.0, %v1775
        %1777 = vmatmul.f32.gmra.mxu0 %v1524
        %v1778 = vpop.f32.mrf.mxu0
        %v1779 = vadd.f32 0.0, %v1778
        %1780 = vmatmul.f32.gmra.mxu0 %v1526
        %v1781 = vpop.f32.mrf.mxu0
        %v1782 = vadd.f32 0.0, %v1781
        %1783 = vmatmul.f32.gmra.mxu0 %v1528
        %v1784 = vpop.f32.mrf.mxu0
        %v1785 = vadd.f32 0.0, %v1784
        %1786 = vmatmul.f32.gmra.mxu0 %v1530
        %v1787 = vpop.f32.mrf.mxu0
        %v1788 = vadd.f32 0.0, %v1787
        %1789 = vmatmul.f32.gmra.mxu0 %v1532
        %v1790 = vpop.f32.mrf.mxu0
        %v1791 = vadd.f32 0.0, %v1790
        %1792 = vmatmul.f32.gmra.mxu0 %v1534
        %v1793 = vpop.f32.mrf.mxu0
        %v1794 = vadd.f32 0.0, %v1793
        %1795 = vmatmul.f32.gmra.mxu0 %v1536
        %v1796 = vpop.f32.mrf.mxu0
        %v1797 = vadd.f32 0.0, %v1796
        %1798 = vdwg.mxu0
        %1819 = vrot.lane.b32.xlu0 %v1568, 127
        %v1820 = vpop.permute.xlu0 %1819
        %1821 = vrot.lane.b32.xlu0 %v1621, 127
        %v1822 = vpop.permute.xlu0 %1821
        %1823 = vrot.lane.b32.xlu0 %v1674, 127
        %v1824 = vpop.permute.xlu0 %1823
        %1825 = vrot.lane.b32.xlu0 %v1727, 127
        %v1826 = vpop.permute.xlu0 %1825
        %1827 = vrot.lane.b32.xlu0 %v1776, 127
        %v1828 = vpop.permute.xlu0 %1827
        %1829 = vrot.lane.b32.xlu0 %v1571, 127
        %v1830 = vpop.permute.xlu0 %1829
        %1831 = vrot.lane.b32.xlu0 %v1624, 127
        %v1832 = vpop.permute.xlu0 %1831
        %1833 = vrot.lane.b32.xlu0 %v1677, 127
        %v1834 = vpop.permute.xlu0 %1833
        %1835 = vrot.lane.b32.xlu0 %v1730, 127
        %v1836 = vpop.permute.xlu0 %1835
        %1837 = vrot.lane.b32.xlu0 %v1779, 127
        %v1838 = vpop.permute.xlu0 %1837
        %1839 = vrot.lane.b32.xlu0 %v1574, 127
        %v1840 = vpop.permute.xlu0 %1839
        %1841 = vrot.lane.b32.xlu0 %v1627, 127
        %v1842 = vpop.permute.xlu0 %1841
        %1843 = vrot.lane.b32.xlu0 %v1680, 127
        %v1844 = vpop.permute.xlu0 %1843
        %1845 = vrot.lane.b32.xlu0 %v1733, 127
        %v1846 = vpop.permute.xlu0 %1845
        %1847 = vrot.lane.b32.xlu0 %v1782, 127
        %v1848 = vpop.permute.xlu0 %1847
        %1849 = vrot.lane.b32.xlu0 %v1577, 127
        %v1850 = vpop.permute.xlu0 %1849
        %1851 = vrot.lane.b32.xlu0 %v1630, 127
        %v1852 = vpop.permute.xlu0 %1851
        %1853 = vrot.lane.b32.xlu0 %v1683, 127
        %v1854 = vpop.permute.xlu0 %1853
        %1855 = vrot.lane.b32.xlu0 %v1736, 127
        %v1856 = vpop.permute.xlu0 %1855
        %1857 = vrot.lane.b32.xlu0 %v1785, 127
        %v1858 = vpop.permute.xlu0 %1857
        %v1859 = vsel %vm575, %v1820, %v1822
        %v1860 = vsel %vm575, %v1822, %v1824
        %v1861 = vsel %vm575, %v1824, %v1826
        %v1862 = vsel %vm575, %v1826, %v1828
        %v1863 = vsel %vm575, %v1830, %v1832
        %v1864 = vsel %vm575, %v1832, %v1834
        %v1865 = vsel %vm575, %v1834, %v1836
        %v1866 = vsel %vm575, %v1836, %v1838
        %v1867 = vsel %vm575, %v1840, %v1842
        %v1868 = vsel %vm575, %v1842, %v1844
        %v1869 = vsel %vm575, %v1844, %v1846
        %v1870 = vsel %vm575, %v1846, %v1848
        %v1871 = vsel %vm575, %v1850, %v1852
        %v1872 = vsel %vm575, %v1852, %v1854
        %v1873 = vsel %vm575, %v1854, %v1856
        %v1874 = vsel %vm575, %v1856, %v1858
        %v1891 = vadd.f32 %v1556, %v1859
        %v1892 = vadd.f32 %v1609, %v1860
        %v1893 = vadd.f32 %v1662, %v1861
        %v1894 = vadd.f32 %v1715, %v1862
        %v1895 = vadd.f32 %v1559, %v1863
        %v1896 = vadd.f32 %v1612, %v1864
        %v1897 = vadd.f32 %v1665, %v1865
        %v1898 = vadd.f32 %v1718, %v1866
        %v1899 = vadd.f32 %v1562, %v1867
        %v1900 = vadd.f32 %v1615, %v1868
        %v1901 = vadd.f32 %v1668, %v1869
        %v1902 = vadd.f32 %v1721, %v1870
        %v1903 = vadd.f32 %v1565, %v1871
        %v1904 = vadd.f32 %v1618, %v1872
        %v1905 = vadd.f32 %v1671, %v1873
        %v1906 = vadd.f32 %v1724, %v1874
        %1927 = vrot.lane.b32.xlu0 %v1580, 126
        %v1928 = vpop.permute.xlu0 %1927
        %1929 = vrot.lane.b32.xlu0 %v1633, 126
        %v1930 = vpop.permute.xlu0 %1929
        %1931 = vrot.lane.b32.xlu0 %v1686, 126
        %v1932 = vpop.permute.xlu0 %1931
        %1933 = vrot.lane.b32.xlu0 %v1739, 126
        %v1934 = vpop.permute.xlu0 %1933
        %1935 = vrot.lane.b32.xlu0 %v1788, 126
        %v1936 = vpop.permute.xlu0 %1935
        %1937 = vrot.lane.b32.xlu0 %v1583, 126
        %v1938 = vpop.permute.xlu0 %1937
        %1939 = vrot.lane.b32.xlu0 %v1636, 126
        %v1940 = vpop.permute.xlu0 %1939
        %1941 = vrot.lane.b32.xlu0 %v1689, 126
        %v1942 = vpop.permute.xlu0 %1941
        %1943 = vrot.lane.b32.xlu0 %v1742, 126
        %v1944 = vpop.permute.xlu0 %1943
        %1945 = vrot.lane.b32.xlu0 %v1791, 126
        %v1946 = vpop.permute.xlu0 %1945
        %1947 = vrot.lane.b32.xlu0 %v1586, 126
        %v1948 = vpop.permute.xlu0 %1947
        %1949 = vrot.lane.b32.xlu0 %v1639, 126
        %v1950 = vpop.permute.xlu0 %1949
        %1951 = vrot.lane.b32.xlu0 %v1692, 126
        %v1952 = vpop.permute.xlu0 %1951
        %1953 = vrot.lane.b32.xlu0 %v1745, 126
        %v1954 = vpop.permute.xlu0 %1953
        %1955 = vrot.lane.b32.xlu0 %v1794, 126
        %v1956 = vpop.permute.xlu0 %1955
        %1957 = vrot.lane.b32.xlu0 %v1589, 126
        %v1958 = vpop.permute.xlu0 %1957
        %1959 = vrot.lane.b32.xlu0 %v1642, 126
        %v1960 = vpop.permute.xlu0 %1959
        %1961 = vrot.lane.b32.xlu0 %v1695, 126
        %v1962 = vpop.permute.xlu0 %1961
        %1963 = vrot.lane.b32.xlu0 %v1748, 126
        %v1964 = vpop.permute.xlu0 %1963
        %1965 = vrot.lane.b32.xlu0 %v1797, 126
        %v1966 = vpop.permute.xlu0 %1965
        %v1967 = vsel %vm692, %v1928, %v1930
        %v1968 = vsel %vm692, %v1930, %v1932
        %v1969 = vsel %vm692, %v1932, %v1934
        %v1970 = vsel %vm692, %v1934, %v1936
        %v1971 = vsel %vm692, %v1938, %v1940
        %v1972 = vsel %vm692, %v1940, %v1942
        %v1973 = vsel %vm692, %v1942, %v1944
        %v1974 = vsel %vm692, %v1944, %v1946
        %v1975 = vsel %vm692, %v1948, %v1950
        %v1976 = vsel %vm692, %v1950, %v1952
        %v1977 = vsel %vm692, %v1952, %v1954
        %v1978 = vsel %vm692, %v1954, %v1956
        %v1979 = vsel %vm692, %v1958, %v1960
        %v1980 = vsel %vm692, %v1960, %v1962
        %v1981 = vsel %vm692, %v1962, %v1964
        %v1982 = vsel %vm692, %v1964, %v1966
        %v1999 = vadd.f32 %v1891, %v1967
        %v2000 = vadd.f32 %v1892, %v1968
        %v2001 = vadd.f32 %v1893, %v1969
        %v2002 = vadd.f32 %v1894, %v1970
        %v2003 = vadd.f32 %v1895, %v1971
        %v2004 = vadd.f32 %v1896, %v1972
        %v2005 = vadd.f32 %v1897, %v1973
        %v2006 = vadd.f32 %v1898, %v1974
        %v2007 = vadd.f32 %v1899, %v1975
        %v2008 = vadd.f32 %v1900, %v1976
        %v2009 = vadd.f32 %v1901, %v1977
        %v2010 = vadd.f32 %v1902, %v1978
        %v2011 = vadd.f32 %v1903, %v1979
        %v2012 = vadd.f32 %v1904, %v1980
        %v2013 = vadd.f32 %v1905, %v1981
        %v2014 = vadd.f32 %v1906, %v1982
        %2015 = vset.pattern.permute.xlu0 72
        %2016 = vperm.xlu0 %2015, %v171
        %v2017 = vpop.permute.xlu0 %2016
        %2019 = vset.pattern.permute.xlu0 72
        %2020 = vperm.xlu0 %2019, %v172
        %v2021 = vpop.permute.xlu0 %2020
        %2023 = vset.pattern.permute.xlu0 72
        %2024 = vperm.xlu0 %2023, %v173
        %v2025 = vpop.permute.xlu0 %2024
        %2027 = vset.pattern.permute.xlu0 72
        %2028 = vperm.xlu0 %2027, %v174
        %v2029 = vpop.permute.xlu0 %2028
        %v2031 = vadd.f32 %v1999, %v2017
        %v2032 = vadd.f32 %v2000, %v2017
        %v2033 = vadd.f32 %v2001, %v2017
        %v2034 = vadd.f32 %v2002, %v2017
        %v2035 = vadd.f32 %v2003, %v2021
        %v2036 = vadd.f32 %v2004, %v2021
        %v2037 = vadd.f32 %v2005, %v2021
        %v2038 = vadd.f32 %v2006, %v2021
        %v2039 = vadd.f32 %v2007, %v2025
        %v2040 = vadd.f32 %v2008, %v2025
        %v2041 = vadd.f32 %v2009, %v2025
        %v2042 = vadd.f32 %v2010, %v2025
        %v2043 = vadd.f32 %v2011, %v2029
        %v2044 = vadd.f32 %v2012, %v2029
        %v2045 = vadd.f32 %v2013, %v2029
        %v2046 = vadd.f32 %v2014, %v2029
        %v2047 = vmax.f32 %v2031, 0.0
        %v2048 = vmax.f32 %v2032, 0.0
        %v2049 = vmax.f32 %v2033, 0.0
        %v2050 = vmax.f32 %v2034, 0.0
        %v2051 = vmax.f32 %v2035, 0.0
        %v2052 = vmax.f32 %v2036, 0.0
        %v2053 = vmax.f32 %v2037, 0.0
        %v2054 = vmax.f32 %v2038, 0.0
        %v2055 = vmax.f32 %v2039, 0.0
        %v2056 = vmax.f32 %v2040, 0.0
        %v2057 = vmax.f32 %v2041, 0.0
        %v2058 = vmax.f32 %v2042, 0.0
        %v2059 = vmax.f32 %v2043, 0.0
        %v2060 = vmax.f32 %v2044, 0.0
        %v2061 = vmax.f32 %v2045, 0.0
        %v2062 = vmax.f32 %v2046, 0.0
        %2063 = vst [vmem:[%s146] sm:$0xff] %v2047
        %2064 = vst [vmem:[%s146 + $0x8] sm:$0xff] %v2048
        %2065 = vst [vmem:[%s146 + $0x10] sm:$0xff] %v2049
        %2066 = vst [vmem:[%s146 + $0x18] sm:$0xff] %v2050
        %2067 = vst [vmem:[%s146 + $0x20] sm:$0xff] %v2051
        %2068 = vst [vmem:[%s146 + $0x28] sm:$0xff] %v2052
        %2069 = vst [vmem:[%s146 + $0x30] sm:$0xff] %v2053
        %2070 = vst [vmem:[%s146 + $0x38] sm:$0xff] %v2054
        %2071 = vst [vmem:[%s146 + $0x40] sm:$0xff] %v2055
        %2072 = vst [vmem:[%s146 + $0x48] sm:$0xff] %v2056
        %2073 = vst [vmem:[%s146 + $0x50] sm:$0xff] %v2057
        %2074 = vst [vmem:[%s146 + $0x58] sm:$0xff] %v2058
        %2075 = vst [vmem:[%s146 + $0x60] sm:$0xff] %v2059
        %2076 = vst [vmem:[%s146 + $0x68] sm:$0xff] %v2060
        %2077 = vst [vmem:[%s146 + $0x70] sm:$0xff] %v2061
        %2078 = vst [vmem:[%s146 + $0x78] sm:$0xff] %v2062
        %s2079 = sand.u32 %s82, 1
        %s2080 = sand.u32 %s82, 1
        %s2081 = smul.addr %s2080, 128
        %s2082 = scalar_lea.vmem [#allocation2], %s2081
        // Predicated region
        $region29: #{wav_encoder_fwd.1} parent=27 // pred_check
          %p2083 = pneg %p92
        $region30: #{wav_encoder_fwd.1} parent=27 // pred_check_branch
          %2085 = sbr.rel (%p2083) target = $region32
        $region31: #{wav_encoder_fwd.1} parent=27 // pred_region
          %s2086 = smul.u32 4, %s18
          %s2087 = smul.addr %s17, 144
          %s2088 = sadd.s32 %s2086, %s2087
          %s2089 = smul.addr %s2088, 8
          %s2090 = scalar_lea.vmem %s2, %s2089
          // Predicated region
          $region33: #{wav_encoder_fwd.1} parent=31 // pred_check
            _
          $region34: #{wav_encoder_fwd.1} parent=31 // pred_check_branch
            %2092 = sbr.rel (0) target = $region36
          $region35: #{wav_encoder_fwd.1} parent=31 // pred_region
            // Predicated region
            $region37: #{wav_encoder_fwd.1} parent=35 // pred_check
              _
            $region38: #{wav_encoder_fwd.1} parent=35 // pred_check_branch
              %2094 = sbr.rel (0) target = $region40
            $region39: #{wav_encoder_fwd.1} parent=35 // pred_region
              loop: start=0, step=1, limit=1
              $region41: #{wav_encoder_fwd.1} parent=39 // loop_pre_header
                _
              $region42: #{wav_encoder_fwd.1} parent=39 // loop_header
                %s2096 = sphi 0, %s2100
                %p2097 = scmp.ge.s32.totalorder %s2096, 1
                %s2101 = sphi %s2082, %s2082
                %s2102 = sphi %s2090, %s2090
              $region43: #{wav_encoder_fwd.1} parent=39 // loop_header_branch
                %2099 = sbr.rel (%p2097) target = $region47
              $region44: #{wav_encoder_fwd.1} parent=39 // loop_body
                %v2103 = vld [vmem:[%s2101] sm:$0xff]
                %2104 = vst [vmem:[%s2102] sm:$0xff] %v2103
                %v2105 = vld [vmem:[%s2101 + $0x8] sm:$0xff]
                %2106 = vst [vmem:[%s2102 + $0x8] sm:$0xff] %v2105
                %v2107 = vld [vmem:[%s2101 + $0x10] sm:$0xff]
                %2108 = vst [vmem:[%s2102 + $0x10] sm:$0xff] %v2107
                %v2109 = vld [vmem:[%s2101 + $0x18] sm:$0xff]
                %2110 = vst [vmem:[%s2102 + $0x18] sm:$0xff] %v2109
                %v2111 = vld [vmem:[%s2101 + $0x20] sm:$0xff]
                %2112 = vst [vmem:[%s2102 + $0x120] sm:$0xff] %v2111
                %v2113 = vld [vmem:[%s2101 + $0x28] sm:$0xff]
                %2114 = vst [vmem:[%s2102 + $0x128] sm:$0xff] %v2113
                %v2115 = vld [vmem:[%s2101 + $0x30] sm:$0xff]
                %2116 = vst [vmem:[%s2102 + $0x130] sm:$0xff] %v2115
                %v2117 = vld [vmem:[%s2101 + $0x38] sm:$0xff]
                %2118 = vst [vmem:[%s2102 + $0x138] sm:$0xff] %v2117
                %v2119 = vld [vmem:[%s2101 + $0x40] sm:$0xff]
                %2120 = vst [vmem:[%s2102 + $0x240] sm:$0xff] %v2119
                %v2121 = vld [vmem:[%s2101 + $0x48] sm:$0xff]
                %2122 = vst [vmem:[%s2102 + $0x248] sm:$0xff] %v2121
                %v2123 = vld [vmem:[%s2101 + $0x50] sm:$0xff]
                %2124 = vst [vmem:[%s2102 + $0x250] sm:$0xff] %v2123
                %v2125 = vld [vmem:[%s2101 + $0x58] sm:$0xff]
                %2126 = vst [vmem:[%s2102 + $0x258] sm:$0xff] %v2125
                %v2127 = vld [vmem:[%s2101 + $0x60] sm:$0xff]
                %2128 = vst [vmem:[%s2102 + $0x360] sm:$0xff] %v2127
                %v2129 = vld [vmem:[%s2101 + $0x68] sm:$0xff]
                %2130 = vst [vmem:[%s2102 + $0x368] sm:$0xff] %v2129
                %v2131 = vld [vmem:[%s2101 + $0x70] sm:$0xff]
                %2132 = vst [vmem:[%s2102 + $0x370] sm:$0xff] %v2131
                %v2133 = vld [vmem:[%s2101 + $0x78] sm:$0xff]
                %2134 = vst [vmem:[%s2102 + $0x378] sm:$0xff] %v2133
              $region45: #{wav_encoder_fwd.1} parent=39 // loop_footer
                %s2100 = sadd.s32 1, %s2096
              $region46: #{wav_encoder_fwd.1} parent=39 // loop_footer_branch
                %2095 = sbr.rel target = $region42
              $region47: #{wav_encoder_fwd.1} parent=39 // loop_exit
                _
            $region40: #{wav_encoder_fwd.1} parent=35 // pred_fallthru
              _
            // Predicated region
            $region48: #{wav_encoder_fwd.1} parent=35 // pred_check
              _
            $region49: #{wav_encoder_fwd.1} parent=35 // pred_check_branch
              %2136 = sbr.rel target = $region51
            $region50: #{wav_encoder_fwd.1} parent=35 // pred_region
              _
            $region51: #{wav_encoder_fwd.1} parent=35 // pred_fallthru
              _
          $region36: #{wav_encoder_fwd.1} parent=31 // pred_fallthru
            _
          %2137 = vnop
        $region32: #{wav_encoder_fwd.1} parent=27 // pred_fallthru
          _
      $region28: #{wav_encoder_fwd.1} parent=5 // pred_fallthru
        _
      %p2138 = scmp.le.s32.totalorder 2, %s8
      // Predicated region
      $region52: #{wav_encoder_fwd.1} parent=5 // pred_check
        %p2139 = pneg %p2138
      $region53: #{wav_encoder_fwd.1} parent=5 // pred_check_branch
        %2141 = sbr.rel (%p2139) target = $region55
      $region54: #{wav_encoder_fwd.1} parent=5 // pred_region
        %s2142 = ssub.s32 %s8, 2
        // Predicated region
        $region56: #{wav_encoder_fwd.1} parent=54 // pred_check
          %p2143 = pneg %p98
        $region57: #{wav_encoder_fwd.1} parent=54 // pred_check_branch
          %2145 = sbr.rel (%p2143) target = $region59
        $region58: #{wav_encoder_fwd.1} parent=54 // pred_region
          %s2146 = sand.u32 %s83, 1
          %s2147 = sand.u32 %s83, 1
          %s2148 = smul.addr %s2147, 128
          %s2149 = scalar_lea.vmem [#allocation2], %s2148
        $region59: #{wav_encoder_fwd.1} parent=54 // pred_fallthru
          _
      $region55: #{wav_encoder_fwd.1} parent=5 // pred_fallthru
        _
    $region6: #{wav_encoder_fwd.1} parent=1 // loop_footer
      %s12 = sadd.s32 1, %s8
    $region7: #{wav_encoder_fwd.1} parent=1 // loop_footer_branch
      %7 = sbr.rel target = $region3
    $region8: #{wav_encoder_fwd.1} parent=1 // loop_exit
      _

</llo_original>
